<compile_context>
chip_gen: v7x
topology: tpu7x:2x2x1
jax: 0.10.0
libtpu: 0.0.40
codegen_flags: <defaults>
</compile_context>

<pallas_src>
import jax
import jax.numpy as jnp
from jax.experimental import pallas as pl
from jax.experimental.pallas import tpu as pltpu


def _round_up(x, m):
    return ((x + m - 1) // m) * m


def _sublane_multiple(dtype):
    # vregs pack sub-32-bit dtypes along sublanes: f32 -> 8, bf16 -> 16, int8 -> 32.
    return max(8, 32 // jnp.dtype(dtype).itemsize)


def _vmem_capacity_bytes():
    try:
        info = pltpu.get_tpu_info()
        cap = getattr(info, "vmem_capacity_bytes", None)
        if cap:
            return int(cap)
    except Exception:
        pass
    return 64 * 1024 * 1024  # conservative fallback: v7x has 64 MiB / TensorCore


def _vmem_estimate(tm, tn, h, xb, wb):
    """Bytes for one set of tiles (Pallas double-buffers) + the f32 accumulator."""
    per_buffer = (
        tm * h * xb        # x tile
        + 2 * h * tn * wb  # gate + up weight tiles
        + tn * h * wb      # c_proj weight tile
        + tm * h * xb      # output tile
    )
    return 2 * per_buffer + tm * h * 4


def _pick_tn(i_half, tn_req):
    """Pick the intermediate (reduction) tile width.

    Prefers a divisor of I_half >= 256 (full MXU width on v6e/v7x, and the
    fused weight can be used in place with no copy).  Falls back to padding
    the intermediate dim only when no such divisor exists.
    Returns (tn, i_pad).
    """
    tn_req = max(128, (min(tn_req, 512) // 128) * 128)
    for cand in (512, 384, 256):
        if cand <= tn_req and cand <= i_half and i_half % cand == 0:
            return cand, i_half
    if i_half <= tn_req:
        tn = _round_up(i_half, 128)
        return tn, tn
    tn = max(256, tn_req)
    return tn, _round_up(i_half, tn)


# ----------------------------------------------------------------------------
# Kernels
# ----------------------------------------------------------------------------

def _qwen_mlp_kernel_acc(x_ref, wg_ref, wu_ref, wc_ref, o_ref, acc_ref):
    """Multi-step reduction: grid axis 1 is the intermediate (reduction) axis.

    x_ref  : (tm, H)   hidden-state tile (native dtype, e.g. bf16)
    wg_ref : (H, tn)   gate (w2) weight tile
    wu_ref : (H, tn)   up   (w1) weight tile
    wc_ref : (tn, H)   c_proj weight tile
    o_ref  : (tm, H)   output tile (written on the last reduction step)
    acc_ref: (tm, H)   f32 accumulator (VMEM scratch, resident across n)
    """
    n = pl.program_id(1)

    @pl.when(n == 0)
    def _():
        acc_ref[...] = jnp.zeros_like(acc_ref)

    x = x_ref[...]
    gate = jnp.dot(x, wg_ref[...], preferred_element_type=jnp.float32)
    up = jnp.dot(x, wu_ref[...], preferred_element_type=jnp.float32)
    # silu(gate) * up in f32 (sigmoid uses the EUP slot).
    h = (gate * jax.nn.sigmoid(gate)) * up

    # Cast back to the weight dtype before c_proj (matches the module numerics).
    acc_ref[...] += jnp.dot(
        h.astype(wc_ref.dtype), wc_ref[...], preferred_element_type=jnp.float32
    )

    @pl.when(n == pl.num_programs(1) - 1)
    def _():
        o_ref[...] = acc_ref[...].astype(o_ref.dtype)


def _qwen_mlp_kernel_single(x_ref, wg_ref, wu_ref, wc_ref, o_ref):
    """Single reduction step: no scratch accumulator, direct write."""
    x = x_ref[...]
    gate = jnp.dot(x, wg_ref[...], preferred_element_type=jnp.float32)
    up = jnp.dot(x, wu_ref[...], preferred_element_type=jnp.float32)
    h = (gate * jax.nn.sigmoid(gate)) * up
    o_ref[...] = jnp.dot(
        h.astype(wc_ref.dtype), wc_ref[...], preferred_element_type=jnp.float32
    ).astype(o_ref.dtype)


# ----------------------------------------------------------------------------
# Wrapper
# ----------------------------------------------------------------------------

def qwen_mlp(hidden_states, w_gate_up, w_c_proj, *, tm=1024, tn=512):
    """Fused QwenMLP forward: c_proj( silu(x @ w2) * (x @ w1) ).

    hidden_states : (T, H)
    w_gate_up     : (H, 2 * I_half)  [:, :I_half] = w2 (gate), [:, I_half:] = w1 (up)
    w_c_proj      : (I_half, H)
    """
    t, h = hidden_states.shape
    i_half = w_c_proj.shape[0]
    assert w_gate_up.shape == (h, 2 * i_half)

    x_dtype = hidden_states.dtype
    xb = jnp.dtype(x_dtype).itemsize
    wb = jnp.dtype(w_gate_up.dtype).itemsize

    vmem_cap = _vmem_capacity_bytes()
    budget = int(0.8 * vmem_cap)

    # --- intermediate (reduction) tiling -------------------------------------
    tn_eff, i_pad = _pick_tn(i_half, tn)
    nn = i_pad // tn_eff  # number of reduction blocks

    if i_pad == i_half:
        # Zero-copy path: pass the fused weight twice with offset index maps.
        wg_in, wu_in, wc_in = w_gate_up, w_gate_up, w_c_proj
        up_off = nn
    else:
        # TODO(synk): hoist this one-time split+pad to weight-load time.  It is
        # only hit when I_half has no >=256 divisor; padding is mathematically
        # inert (gate pad -> silu(0) * up = 0, and the c_proj pad rows are 0).
        pad = i_pad - i_half
        wg_in = jnp.pad(w_gate_up[:, :i_half], ((0, 0), (0, pad)))
        wu_in = jnp.pad(w_gate_up[:, i_half:], ((0, 0), (0, pad)))
        wc_in = jnp.pad(w_c_proj, ((0, pad), (0, 0)))
        up_off = 0

    # --- token tiling (dtype-aware sublane rounding) -------------------------
    sub = _sublane_multiple(x_dtype)
    tm_cap = min(tm, _round_up(t, sub))
    cands = sorted(
        {c for c in (tm_cap, 1024, 512, 256, 128, 64, 32, 16, 8) if c <= tm_cap},
        reverse=True,
    )
    tm_eff = cands[-1]
    for cand in cands:
        if _vmem_estimate(cand, tn_eff, h, xb, wb) <= budget:
            tm_eff = cand
            break

    t_pad = _round_up(t, tm_eff)
    x = hidden_states
    if t_pad != t:
        x = jnp.pad(x, ((0, t_pad - t), (0, 0)))
    nt = t_pad // tm_eff

    est = _vmem_estimate(tm_eff, tn_eff, h, xb, wb)
    vmem_limit = int(min(max(int(est * 1.25), 32 * 1024 * 1024),
                         int(0.9 * vmem_cap)))

    cost = pl.CostEstimate(
        flops=int(6 * t_pad * h * i_pad),          # gate + up + c_proj matmuls
        transcendentals=int(t_pad * i_pad),        # sigmoid
        bytes_accessed=int(2 * t_pad * h * xb + 3 * h * i_pad * wb),
    )

    # Decode on multi-core chips: a single token tile can't be sharded across
    # TensorCores, so split the (weight-bandwidth-bound) reduction across a
    # leading "parallel" axis and add the two f32 partial sums outside.
    use_split = (nt == 1) and (nn >= 2) and (nn % 2 == 0)

    if nn == 1:
        out = pl.pallas_call(
            _qwen_mlp_kernel_single,
            out_shape=jax.ShapeDtypeStruct((t_pad, h), x_dtype),
            grid_spec=pltpu.PrefetchScalarGridSpec(
                num_scalar_prefetch=0,
                grid=(nt,),
                in_specs=[
                    pl.BlockSpec((tm_eff, h), lambda i: (i, 0)),
                    pl.BlockSpec((h, tn_eff), lambda i: (0, 0)),
                    pl.BlockSpec((h, tn_eff), lambda i: (0, up_off)),
                    pl.BlockSpec((tn_eff, h), lambda i: (0, 0)),
                ],
                out_specs=pl.BlockSpec((tm_eff, h), lambda i: (i, 0)),
            ),
            compiler_params=pltpu.CompilerParams(
                dimension_semantics=("parallel",),
                vmem_limit_bytes=vmem_limit,
            ),
            cost_estimate=cost,
        )(x, wg_in, wu_in, wc_in)
    elif use_split:
        half = nn // 2
        partial = pl.pallas_call(
            _qwen_mlp_kernel_acc,
            out_shape=jax.ShapeDtypeStruct((2 * t_pad, h), jnp.float32),
            grid_spec=pltpu.PrefetchScalarGridSpec(
                num_scalar_prefetch=0,
                grid=(2, half),
                in_specs=[
                    pl.BlockSpec((tm_eff, h), lambda c, n: (0, 0)),
                    pl.BlockSpec((h, tn_eff), lambda c, n: (0, c * half + n)),
                    pl.BlockSpec((h, tn_eff),
                                 lambda c, n: (0, c * half + n + up_off)),
                    pl.BlockSpec((tn_eff, h), lambda c, n: (c * half + n, 0)),
                ],
                out_specs=pl.BlockSpec((tm_eff, h), lambda c, n: (c, 0)),
                scratch_shapes=[pltpu.VMEM((tm_eff, h), jnp.float32)],
            ),
            compiler_params=pltpu.CompilerParams(
                dimension_semantics=("parallel", "arbitrary"),
                vmem_limit_bytes=vmem_limit,
            ),
            cost_estimate=cost,
        )(x, wg_in, wu_in, wc_in)
        out = (partial[:t_pad] + partial[t_pad:]).astype(x_dtype)
    else:
        out = pl.pallas_call(
            _qwen_mlp_kernel_acc,
            out_shape=jax.ShapeDtypeStruct((t_pad, h), x_dtype),
            grid_spec=pltpu.PrefetchScalarGridSpec(
                num_scalar_prefetch=0,
                grid=(nt, nn),
                in_specs=[
                    pl.BlockSpec((tm_eff, h), lambda i, n: (i, 0)),
                    pl.BlockSpec((h, tn_eff), lambda i, n: (0, n)),
                    pl.BlockSpec((h, tn_eff), lambda i, n: (0, n + up_off)),
                    pl.BlockSpec((tn_eff, h), lambda i, n: (n, 0)),
                ],
                out_specs=pl.BlockSpec((tm_eff, h), lambda i, n: (i, 0)),
                scratch_shapes=[pltpu.VMEM((tm_eff, h), jnp.float32)],
            ),
            compiler_params=pltpu.CompilerParams(
                dimension_semantics=("parallel", "arbitrary"),
                vmem_limit_bytes=vmem_limit,
            ),
            cost_estimate=cost,
        )(x, wg_in, wu_in, wc_in)

    if t_pad != t:
        out = out[:t]
    return out


def qwen_mlp_ref(hidden_states, w_gate_up, w_c_proj):
    i_half = w_c_proj.shape[0]
    gate = jnp.dot(hidden_states, w_gate_up[:, :i_half],
                   preferred_element_type=jnp.float32)
    up = jnp.dot(hidden_states, w_gate_up[:, i_half:],
                 preferred_element_type=jnp.float32)
    h = (jax.nn.silu(gate) * up).astype(w_c_proj.dtype)
    return jnp.dot(h, w_c_proj,
                   preferred_element_type=jnp.float32).astype(hidden_states.dtype)


if __name__ == "__main__":
    DTYPE = jnp.bfloat16
    key = jax.random.PRNGKey(0)
    keys = jax.random.split(key, 4)

    def make_case(k, t, h, i_half):
        kx, kg, kc = jax.random.split(k, 3)
        x = jax.random.normal(kx, (t, h), dtype=jnp.float32).astype(DTYPE)
        wgu = (0.02 * jax.random.normal(kg, (h, 2 * i_half),
                                        dtype=jnp.float32)).astype(DTYPE)
        wc = (0.02 * jax.random.normal(kc, (i_half, h),
                                       dtype=jnp.float32)).astype(DTYPE)
        return x, wgu, wc

    def check(name, out, ref):
        assert out.shape == ref.shape
        assert jnp.allclose(out.astype(jnp.float32), ref.astype(jnp.float32),
                            atol=1e-2, rtol=5e-2), f"{name} mismatch vs reference"

    # 1) Prefill-style: multiple token tiles + multi-step reduction (f32 acc).
    x, wgu, wc = make_case(keys[0], 256, 256, 512)
    out = jax.block_until_ready(qwen_mlp(x, wgu, wc, tm=128, tn=256))
    check("prefill", out, qwen_mlp_ref(x, wgu, wc))

    # 2) Decode-style: one token tile -> reduction split across a parallel axis.
    x, wgu, wc = make_case(keys[1], 8, 256, 512)
    out = jax.block_until_ready(qwen_mlp(x, wgu, wc, tn=256))
    check("decode-split", out, qwen_mlp_ref(x, wgu, wc))

    # 3) Single reduction step -> no scratch accumulator, fused zero-copy weights.
    x, wgu, wc = make_case(keys[2], 64, 256, 256)
    out = jax.block_until_ready(qwen_mlp(x, wgu, wc))
    check("single-step", out, qwen_mlp_ref(x, wgu, wc))

    # 4) Intermediate size with no >=256 divisor -> padded (inert) weight path.
    x, wgu, wc = make_case(keys[3], 8, 128, 320)
    out = jax.block_until_ready(qwen_mlp(x, wgu, wc, tn=256))
    check("padded", out, qwen_mlp_ref(x, wgu, wc))

    print("KERNEL_OK")
</pallas_src>

<mosaic_0001>
module attributes {stable_mosaic.version = 11 : i64} {
  func.func @_qwen_mlp_kernel_acc(%arg0: i32, %arg1: i32, %arg2: memref<128x256xbf16, #tpu.memory_space<vmem>>, %arg3: memref<256x256xbf16, #tpu.memory_space<vmem>>, %arg4: memref<256x256xbf16, #tpu.memory_space<vmem>>, %arg5: memref<256x256xbf16, #tpu.memory_space<vmem>>, %arg6: memref<128x256xbf16, #tpu.memory_space<vmem>>, %arg7: memref<128x256xf32, #tpu.memory_space<vmem>>) attributes {dimension_semantics = [#tpu.dimension_semantics<parallel>, #tpu.dimension_semantics<arbitrary>], iteration_bounds = array<i64: 2, 2>, scalar_prefetch = 0 : i64, scratch_operands = 1 : i64, tpu.core_type = #tpu.core_type<tc>, window_params = [{transform_indices = @transform_0, window_bounds = array<i64: 128, 256>}, {transform_indices = @transform_1, window_bounds = array<i64: 256, 256>}, {transform_indices = @transform_2, window_bounds = array<i64: 256, 256>}, {transform_indices = @transform_3, window_bounds = array<i64: 256, 256>}, {transform_indices = @transform_4, window_bounds = array<i64: 128, 256>}]} {
    %c0_i32 = arith.constant 0 : i32
    %0 = arith.cmpi eq, %arg1, %c0_i32 : i32
    %1 = arith.extui %0 : i1 to i32
    %c0_i32_0 = arith.constant 0 : i32
    %2 = arith.cmpi ne, %1, %c0_i32_0 : i32
    scf.if %2 {
      %cst_16 = arith.constant 0.000000e+00 : f32
      %24 = vector.broadcast %cst_16 : f32 to vector<128x256xf32>
      %c0_17 = arith.constant 0 : index
      %c0_18 = arith.constant 0 : index
      %25 = vector.load %arg7[%c0_17, %c0_18] : memref<128x256xf32, #tpu.memory_space<vmem>>, vector<128x256xf32>
      tpu.vector_store %arg7[%c0_17, %c0_18], %24 {strides = array<i32>} : memref<128x256xf32, #tpu.memory_space<vmem>>, vector<128x256xf32>,
    } else {
    }
    %c0 = arith.constant 0 : index
    %c0_1 = arith.constant 0 : index
    %3 = vector.load %arg2[%c0, %c0_1] : memref<128x256xbf16, #tpu.memory_space<vmem>>, vector<128x256xbf16>
    %c0_2 = arith.constant 0 : index
    %c0_3 = arith.constant 0 : index
    %4 = vector.load %arg3[%c0_2, %c0_3] : memref<256x256xbf16, #tpu.memory_space<vmem>>, vector<256x256xbf16>
    %cst = arith.constant dense<0.000000e+00> : vector<128x256xf32>
    %5 = tpu.matmul %3, %4, %cst {dimension_numbers = #tpu.dot_dimension_numbers<[1], [0], [0], [1], [0, 0, 1, 1], [], []>} : vector<128x256xbf16>, vector<256x256xbf16>, vector<128x256xf32> -> vector<128x256xf32>
    %c0_4 = arith.constant 0 : index
    %c0_5 = arith.constant 0 : index
    %6 = vector.load %arg4[%c0_4, %c0_5] : memref<256x256xbf16, #tpu.memory_space<vmem>>, vector<256x256xbf16>
    %cst_6 = arith.constant dense<0.000000e+00> : vector<128x256xf32>
    %7 = tpu.matmul %3, %6, %cst_6 {dimension_numbers = #tpu.dot_dimension_numbers<[1], [0], [0], [1], [0, 0, 1, 1], [], []>} : vector<128x256xbf16>, vector<256x256xbf16>, vector<128x256xf32> -> vector<128x256xf32>
    %8 = arith.negf %5 : vector<128x256xf32>
    %9 = math.exp %8 : vector<128x256xf32>
    %cst_7 = arith.constant 1.000000e+00 : f32
    %10 = vector.broadcast %cst_7 : f32 to vector<128x256xf32>
    %11 = arith.addf %10, %9 : vector<128x256xf32>
    %12 = arith.divf %10, %11 : vector<128x256xf32>
    %13 = arith.mulf %5, %12 : vector<128x256xf32>
    %14 = arith.mulf %13, %7 : vector<128x256xf32>
    %c0_8 = arith.constant 0 : index
    %c0_9 = arith.constant 0 : index
    %15 = vector.load %arg7[%c0_8, %c0_9] : memref<128x256xf32, #tpu.memory_space<vmem>>, vector<128x256xf32>
    %16 = arith.truncf %14 : vector<128x256xf32> to vector<128x256xbf16>
    %c0_10 = arith.constant 0 : index
    %c0_11 = arith.constant 0 : index
    %17 = vector.load %arg5[%c0_10, %c0_11] : memref<256x256xbf16, #tpu.memory_space<vmem>>, vector<256x256xbf16>
    %cst_12 = arith.constant dense<0.000000e+00> : vector<128x256xf32>
    %18 = tpu.matmul %16, %17, %cst_12 {dimension_numbers = #tpu.dot_dimension_numbers<[1], [0], [0], [1], [0, 0, 1, 1], [], []>} : vector<128x256xbf16>, vector<256x256xbf16>, vector<128x256xf32> -> vector<128x256xf32>
    %19 = arith.addf %15, %18 : vector<128x256xf32>
    %c0_13 = arith.constant 0 : index
    %c0_14 = arith.constant 0 : index
    %20 = vector.load %arg7[%c0_13, %c0_14] : memref<128x256xf32, #tpu.memory_space<vmem>>, vector<128x256xf32>
    tpu.vector_store %arg7[%c0_13, %c0_14], %19 {strides = array<i32>} : memref<128x256xf32, #tpu.memory_space<vmem>>, vector<128x256xf32>,
    %c1_i32 = arith.constant 1 : i32
    %21 = arith.cmpi eq, %arg1, %c1_i32 : i32
    %22 = arith.extui %21 : i1 to i32
    %c0_i32_15 = arith.constant 0 : i32
    %23 = arith.cmpi ne, %22, %c0_i32_15 : i32
    scf.if %23 {
      %c0_16 = arith.constant 0 : index
      %c0_17 = arith.constant 0 : index
      %24 = vector.load %arg7[%c0_16, %c0_17] : memref<128x256xf32, #tpu.memory_space<vmem>>, vector<128x256xf32>
      %25 = arith.truncf %24 : vector<128x256xf32> to vector<128x256xbf16>
      %c0_18 = arith.constant 0 : index
      %c0_19 = arith.constant 0 : index
      %26 = vector.load %arg6[%c0_18, %c0_19] : memref<128x256xbf16, #tpu.memory_space<vmem>>, vector<128x256xbf16>
      tpu.vector_store %arg6[%c0_18, %c0_19], %25 {strides = array<i32>} : memref<128x256xbf16, #tpu.memory_space<vmem>>, vector<128x256xbf16>,
    } else {
    }
    return
  }
  func.func @transform_0(%arg0: i32, %arg1: i32) -> (i32, i32) {
    %c0_i32 = arith.constant 0 : i32
    %c0_i32_0 = arith.constant 0 : i32
    return %arg0, %c0_i32 : i32, i32
  }
  func.func @transform_1(%arg0: i32, %arg1: i32) -> (i32, i32) {
    %c0_i32 = arith.constant 0 : i32
    %c0_i32_0 = arith.constant 0 : i32
    return %c0_i32, %arg1 : i32, i32
  }
  func.func @transform_2(%arg0: i32, %arg1: i32) -> (i32, i32) {
    %c2_i32 = arith.constant 2 : i32
    %0 = arith.addi %arg1, %c2_i32 : i32
    %c0_i32 = arith.constant 0 : i32
    %c0_i32_0 = arith.constant 0 : i32
    return %c0_i32, %0 : i32, i32
  }
  func.func @transform_3(%arg0: i32, %arg1: i32) -> (i32, i32) {
    %c0_i32 = arith.constant 0 : i32
    %c0_i32_0 = arith.constant 0 : i32
    return %arg1, %c0_i32 : i32, i32
  }
  func.func @transform_4(%arg0: i32, %arg1: i32) -> (i32, i32) {
    %c0_i32 = arith.constant 0 : i32
    %c0_i32_0 = arith.constant 0 : i32
    return %arg0, %c0_i32 : i32, i32
  }
}

</mosaic_0001>

<llo_original>
// kernel: tpu_custom_call.1
$region0: #{tpu_custom_call.1}
  #allocation0 [shape = 'u32[]', space=smem, size = 0x4, offset = 0x4, fixed_abs, tag = 'smem constant byte address 0x4 - core index']
  #allocation1 [shape = 'u32[144,128]{1,0:T(1,128)}', space=vmem, size = 0x12000, scoped, tag = 'internal scratch']
  #allocation2 [shape = 'f32[128,256]{1,0:T(8,128)}', space=vmem, size = 0x20000, scoped, tag = 'scratch operand']
  %s0 = inlined_call_operand.hbm [shape: bf16[256,256], index: 0, kind: input, shape index: {}]
  %s1 = inlined_call_operand.hbm [shape: bf16[256,1024], index: 1, kind: input, shape index: {}]
  %s2 = inlined_call_operand.hbm [shape: bf16[256,1024], index: 2, kind: input, shape index: {}]
  %s3 = inlined_call_operand.hbm [shape: bf16[512,256], index: 3, kind: input, shape index: {}]
  %s4 = inlined_call_operand.hbm [shape: bf16[256,256], index: 4, kind: output, shape index: {}]
  %s5 = sld [smem:[#allocation0]]
  $region73: #{tpu_custom_call.1} parent=0
    _
  %s7 = ssub.s32 1, %s5
  %s8 = scalar_select 0, %s7, %s5
  $region1: #{tpu_custom_call.1} parent=0
    #allocation3 [shape = 'u8[131072]{0}', space=vmem, size = 0x20000, scoped, tag = 'input window, operand 0']
    #allocation4 [shape = 's32[2]{0}', space=sflag, size = 0x8, scoped, tag = 'scoped memory for tpu_custom_call.1']
    #allocation5 [shape = 's32[2]{0}', space=sflag, size = 0x8, scoped, tag = 'scoped memory for tpu_custom_call.1']
    #allocation6 [shape = 'u8[262144]{0}', space=vmem, size = 0x40000, scoped, tag = 'input window, operand 1']
    #allocation7 [shape = 's32[2]{0}', space=sflag, size = 0x8, scoped, tag = 'scoped memory for tpu_custom_call.1']
    #allocation8 [shape = 'u8[262144]{0}', space=vmem, size = 0x40000, scoped, tag = 'input window, operand 2']
    #allocation9 [shape = 'u8[262144]{0}', space=vmem, size = 0x40000, scoped, tag = 'input window, operand 3']
    #allocation10 [shape = 's32[2]{0}', space=sflag, size = 0x8, scoped, tag = 'scoped memory for tpu_custom_call.1']
    #allocation11 [shape = 'u8[131072]{0}', space=vmem, size = 0x20000, scoped, tag = 'output window, operand 0']
    %9 = vsyncpa [#allocation4], 0
    %s10 = scalar_lea.sflag [#allocation4], 1
    %11 = vsyncpa %s10, 0
    %12 = vsyncpa [#allocation7], 0
    %s13 = scalar_lea.sflag [#allocation7], 1
    %14 = vsyncpa %s13, 0
    %15 = vsyncpa [#allocation10], 0
    %s16 = scalar_lea.sflag [#allocation10], 1
    %17 = vsyncpa %s16, 0
    %18 = vsyncpa [#allocation5], 0
    %s19 = scalar_lea.sflag [#allocation5], 1
    %20 = vsyncpa %s19, 0
    loop: start=0, step=1, limit=6
    $region2: #{tpu_custom_call.1} parent=1 // loop_pre_header
      _
    $region3: #{tpu_custom_call.1} parent=1 // loop_header
      %s22 = sphi 0, %s26
      %p23 = scmp.ge.s32.totalorder %s22, 6
      %s29 = sphi 0, %s41
      %s30 = sphi 0, %s37
      %s31 = sphi 0, %s29
      %s32 = sphi 0, %s30
      %s33 = sphi 0, %s31
      %s34 = sphi 0, %s32
      %s44 = sphi 0, %s46
      %s47 = sphi 0, %s44
      %s48 = sphi 0, %s47
      %s64 = sphi 0, %s48
      %s70 = sphi 0, %s72
      %s73 = sphi 0, %s70
      %s74 = sphi 0, %s73
      %s90 = sphi 0, %s74
      %s98 = sphi 0, %s100
      %s101 = sphi 0, %s98
      %s102 = sphi 0, %s101
      %s118 = sphi 0, %s102
      %s124 = sphi 0, %s126
      %s127 = sphi 0, %s124
      %s128 = sphi 0, %s127
      %s144 = sphi 0, %s128
      %s150 = sphi 0, %s152
      %s153 = sphi 0, %s150
      %s154 = sphi 0, %s153
      %s170 = sphi 0, %s154
    $region4: #{tpu_custom_call.1} parent=1 // loop_header_branch
      %25 = sbr.rel (%p23) target = $region8
    $region5: #{tpu_custom_call.1} parent=1 // loop_body
      %s27 = ssub.s32 %s22, 1
      %s28 = ssub.s32 %s22, 2
      %s35 = sadd.s32 1, %s30
      %p36 = scmp.ge.s32.totalorder %s35, 2
      %s37 = scalar_select %p36, 0, %s35
      %s38 = sadd.s32 1, %s29
      %s39 = scalar_select %p36, %s38, %s29
      %p40 = scmp.ge.s32.totalorder %s39, 2
      %s41 = scalar_select %p40, 0, %s39
      %s42 = ssub.s32 %s29, %s41
      %p43 = scmp.eq.s32.totalorder %s42, 0
      %s45 = sadd.s32 %s44, 1
      %s46 = scalar_select %p43, %s44, %s45
      %p49 = pneg %p43
      %p50 = scmp.eq.s32.totalorder %s22, 3
      %p51 = por %p49, %p50
      %p52 = scmp.ne.s32.totalorder %s44, %s47
      %p53 = scmp.eq.s32.totalorder %s22, 0
      %p54 = por %p52, %p53
      %p55 = scmp.ne.s32.totalorder %s44, %s47
      %p56 = scmp.eq.s32.totalorder %s27, 3
      %p57 = por %p55, %p56
      %p58 = scmp.ne.s32.totalorder %s47, %s48
      %p59 = scmp.eq.s32.totalorder %s27, 0
      %p60 = por %p58, %p59
      %p61 = scmp.ne.s32.totalorder %s47, %s48
      %p62 = scmp.eq.s32.totalorder %s28, 3
      %p63 = por %p61, %p62
      %p65 = scmp.ne.s32.totalorder %s48, %s64
      %p66 = scmp.eq.s32.totalorder %s28, 0
      %p67 = por %p65, %p66
      %s68 = ssub.s32 %s30, %s37
      %p69 = scmp.eq.s32.totalorder %s68, 0
      %s71 = sadd.s32 %s70, 1
      %s72 = scalar_select %p69, %s70, %s71
      %p75 = pneg %p69
      %p76 = scmp.eq.s32.totalorder %s22, 3
      %p77 = por %p75, %p76
      %p78 = scmp.ne.s32.totalorder %s70, %s73
      %p79 = scmp.eq.s32.totalorder %s22, 0
      %p80 = por %p78, %p79
      %p81 = scmp.ne.s32.totalorder %s70, %s73
      %p82 = scmp.eq.s32.totalorder %s27, 3
      %p83 = por %p81, %p82
      %p84 = scmp.ne.s32.totalorder %s73, %s74
      %p85 = scmp.eq.s32.totalorder %s27, 0
      %p86 = por %p84, %p85
      %p87 = scmp.ne.s32.totalorder %s73, %s74
      %p88 = scmp.eq.s32.totalorder %s28, 3
      %p89 = por %p87, %p88
      %p91 = scmp.ne.s32.totalorder %s74, %s90
      %p92 = scmp.eq.s32.totalorder %s28, 0
      %p93 = por %p91, %p92
      %s94 = sadd.s32 %s30, 2
      %s95 = sadd.s32 %s37, 2
      %s96 = ssub.s32 %s94, %s95
      %p97 = scmp.eq.s32.totalorder %s96, 0
      %s99 = sadd.s32 %s98, 1
      %s100 = scalar_select %p97, %s98, %s99
      %p103 = pneg %p97
      %p104 = scmp.eq.s32.totalorder %s22, 3
      %p105 = por %p103, %p104
      %p106 = scmp.ne.s32.totalorder %s98, %s101
      %p107 = scmp.eq.s32.totalorder %s22, 0
      %p108 = por %p106, %p107
      %p109 = scmp.ne.s32.totalorder %s98, %s101
      %p110 = scmp.eq.s32.totalorder %s27, 3
      %p111 = por %p109, %p110
      %p112 = scmp.ne.s32.totalorder %s101, %s102
      %p113 = scmp.eq.s32.totalorder %s27, 0
      %p114 = por %p112, %p113
      %p115 = scmp.ne.s32.totalorder %s101, %s102
      %p116 = scmp.eq.s32.totalorder %s28, 3
      %p117 = por %p115, %p116
      %p119 = scmp.ne.s32.totalorder %s102, %s118
      %p120 = scmp.eq.s32.totalorder %s28, 0
      %p121 = por %p119, %p120
      %s122 = ssub.s32 %s30, %s37
      %p123 = scmp.eq.s32.totalorder %s122, 0
      %s125 = sadd.s32 %s124, 1
      %s126 = scalar_select %p123, %s124, %s125
      %p129 = pneg %p123
      %p130 = scmp.eq.s32.totalorder %s22, 3
      %p131 = por %p129, %p130
      %p132 = scmp.ne.s32.totalorder %s124, %s127
      %p133 = scmp.eq.s32.totalorder %s22, 0
      %p134 = por %p132, %p133
      %p135 = scmp.ne.s32.totalorder %s124, %s127
      %p136 = scmp.eq.s32.totalorder %s27, 3
      %p137 = por %p135, %p136
      %p138 = scmp.ne.s32.totalorder %s127, %s128
      %p139 = scmp.eq.s32.totalorder %s27, 0
      %p140 = por %p138, %p139
      %p141 = scmp.ne.s32.totalorder %s127, %s128
      %p142 = scmp.eq.s32.totalorder %s28, 3
      %p143 = por %p141, %p142
      %p145 = scmp.ne.s32.totalorder %s128, %s144
      %p146 = scmp.eq.s32.totalorder %s28, 0
      %p147 = por %p145, %p146
      %s148 = ssub.s32 %s29, %s41
      %p149 = scmp.eq.s32.totalorder %s148, 0
      %s151 = sadd.s32 %s150, 1
      %s152 = scalar_select %p149, %s150, %s151
      %p155 = pneg %p149
      %p156 = scmp.eq.s32.totalorder %s22, 3
      %p157 = por %p155, %p156
      %p158 = scmp.ne.s32.totalorder %s150, %s153
      %p159 = scmp.eq.s32.totalorder %s22, 0
      %p160 = por %p158, %p159
      %p161 = scmp.ne.s32.totalorder %s150, %s153
      %p162 = scmp.eq.s32.totalorder %s27, 3
      %p163 = por %p161, %p162
      %p164 = scmp.ne.s32.totalorder %s153, %s154
      %p165 = scmp.eq.s32.totalorder %s27, 0
      %p166 = por %p164, %p165
      %p167 = scmp.ne.s32.totalorder %s153, %s154
      %p168 = scmp.eq.s32.totalorder %s28, 3
      %p169 = por %p167, %p168
      %p171 = scmp.ne.s32.totalorder %s154, %s170
      %p172 = scmp.eq.s32.totalorder %s28, 0
      %p173 = por %p171, %p172
      %p174 = scmp.le.s32.totalorder 1, %s22
      %p175 = scmp.lt.s32.totalorder %s22, 5
      %p176 = pnand %p174, %p175
      %p177 = pneg %p176
      // Predicated region
      $region9: #{tpu_custom_call.1} parent=5 // pred_check
        _
      $region10: #{tpu_custom_call.1} parent=5 // pred_check_branch
        %179 = sbr.rel (%p176) target = $region12
      $region11: #{tpu_custom_call.1} parent=5 // pred_region
        %s180 = ssub.s32 %s22, 1
      $region12: #{tpu_custom_call.1} parent=5 // pred_fallthru
        _
      %p181 = scmp.lt.s32.totalorder %s22, 4
      // Predicated region
      $region13: #{tpu_custom_call.1} parent=5 // pred_check
        %p182 = pneg %p181
      $region14: #{tpu_custom_call.1} parent=5 // pred_check_branch
        %184 = sbr.rel (%p182) target = $region16
      $region15: #{tpu_custom_call.1} parent=5 // pred_region
        // Predicated region
        $region17: #{tpu_custom_call.1} parent=15 // pred_check
          %p185 = pneg %p54
        $region18: #{tpu_custom_call.1} parent=15 // pred_check_branch
          %187 = sbr.rel (%p185) target = $region20
        $region19: #{tpu_custom_call.1} parent=15 // pred_region
          %s188 = sand.u32 %s44, 1
          %s189 = scalar_lea.sflag [#allocation4], %s188
          %s190 = sand.u32 %s44, 1
          %s191 = smul.addr %s190, 128
          %s192 = scalar_lea.vmem [#allocation3], %s191
          %s193 = smul.u32 16, %s29
          %s195 = ssub.s32 2048, 2048
          %196 = vsyncadd %s189, %s195
          %s197 = smul.addr %s193, 2
          %s198 = smul.addr %s197, 64
          %s199 = scalar_lea.hbm %s0, %s198
          %s200 = sshll.u32 %s192, 4
          %s201 = int_to_ptr.vmem [resolvable:$true] %s200
          %206 = dma.hbm_to_vmem [thread:$0]  %s199, 2048, %s201, %s189, 128, 128, 8
        $region20: #{tpu_custom_call.1} parent=15 // pred_fallthru
          _
        // Predicated region
        $region21: #{tpu_custom_call.1} parent=15 // pred_check
          %p207 = pneg %p80
        $region22: #{tpu_custom_call.1} parent=15 // pred_check_branch
          %209 = sbr.rel (%p207) target = $region24
        $region23: #{tpu_custom_call.1} parent=15 // pred_region
          %s210 = sand.u32 %s22, 1
          %s211 = scalar_lea.sflag [#allocation7], %s210
          %s212 = sand.u32 %s70, 1
          %s213 = smul.addr %s212, 256
          %s214 = scalar_lea.vmem [#allocation6], %s213
          %s215 = smul.u32 2, %s30
          %s217 = ssub.s32 4096, 4096
          %218 = vsyncadd %s211, %s217
          %s219 = smul.addr %s215, 64
          %s220 = scalar_lea.hbm %s1, %s219
          %s221 = sshll.u32 %s214, 4
          %s222 = int_to_ptr.vmem [resolvable:$true] %s221
          %227 = dma.hbm_to_vmem [thread:$0]  %s220, 4096, %s222, %s211, 512, 128, 8
        $region24: #{tpu_custom_call.1} parent=15 // pred_fallthru
          _
        // Predicated region
        $region25: #{tpu_custom_call.1} parent=15 // pred_check
          %p228 = pneg %p108
        $region26: #{tpu_custom_call.1} parent=15 // pred_check_branch
          %230 = sbr.rel (%p228) target = $region28
        $region27: #{tpu_custom_call.1} parent=15 // pred_region
          %s231 = sand.u32 %s22, 1
          %s232 = scalar_lea.sflag [#allocation7], %s231
          %s233 = sand.u32 %s98, 1
          %s234 = smul.addr %s233, 256
          %s235 = scalar_lea.vmem [#allocation8], %s234
          %s236 = sadd.s32 %s30, 2
          %s237 = smul.u32 2, %s236
          %s239 = ssub.s32 4096, 4096
          %240 = vsyncadd %s232, %s239
          %s241 = smul.addr %s237, 64
          %s242 = scalar_lea.hbm %s2, %s241
          %s243 = sshll.u32 %s235, 4
          %s244 = int_to_ptr.vmem [resolvable:$true] %s243
          %249 = dma.hbm_to_vmem [thread:$0]  %s242, 4096, %s244, %s232, 512, 128, 8
        $region28: #{tpu_custom_call.1} parent=15 // pred_fallthru
          _
        // Predicated region
        $region29: #{tpu_custom_call.1} parent=15 // pred_check
          %p250 = pneg %p134
        $region30: #{tpu_custom_call.1} parent=15 // pred_check_branch
          %252 = sbr.rel (%p250) target = $region32
        $region31: #{tpu_custom_call.1} parent=15 // pred_region
          %s253 = sand.u32 %s124, 1
          %s254 = scalar_lea.sflag [#allocation10], %s253
          %s255 = sand.u32 %s124, 1
          %s256 = smul.addr %s255, 256
          %s257 = scalar_lea.vmem [#allocation9], %s256
          %s258 = smul.u32 32, %s30
          %s260 = ssub.s32 4096, 4096
          %261 = vsyncadd %s254, %s260
          %s262 = smul.addr %s258, 2
          %s263 = smul.addr %s262, 64
          %s264 = scalar_lea.hbm %s3, %s263
          %s265 = sshll.u32 %s257, 4
          %s266 = int_to_ptr.vmem [resolvable:$true] %s265
          %271 = dma.hbm_to_vmem [thread:$0]  %s264, 4096, %s266, %s254, 128, 128, 8
        $region32: #{tpu_custom_call.1} parent=15 // pred_fallthru
          _
      $region16: #{tpu_custom_call.1} parent=5 // pred_fallthru
        _
      %p272 = scmp.le.s32.totalorder 1, %s22
      %p273 = scmp.lt.s32.totalorder %s22, 5
      %p274 = pnand %p272, %p273
      %p275 = pneg %p274
      // Predicated region
      $region33: #{tpu_custom_call.1} parent=5 // pred_check
        _
      $region34: #{tpu_custom_call.1} parent=5 // pred_check_branch
        %277 = sbr.rel (%p274) target = $region36
      $region35: #{tpu_custom_call.1} parent=5 // pred_region
        %s278 = ssub.s32 %s22, 1
        %s279 = sand.u32 %s47, 1
        %s280 = scalar_lea.sflag [#allocation4], %s279
        %s281 = sand.u32 %s47, 1
        %s282 = smul.addr %s281, 128
        %s283 = scalar_lea.vmem [#allocation3], %s282
        // Predicated region
        $region37: #{tpu_custom_call.1} parent=35 // pred_check
          %p284 = pneg %p60
        $region38: #{tpu_custom_call.1} parent=35 // pred_check_branch
          %286 = sbr.rel (%p284) target = $region40
        $region39: #{tpu_custom_call.1} parent=35 // pred_region
          %287 = dma.done %s280, 2048
        $region40: #{tpu_custom_call.1} parent=35 // pred_fallthru
          _
        %s288 = sand.u32 %s27, 1
        %s289 = scalar_lea.sflag [#allocation7], %s288
        %s290 = sand.u32 %s73, 1
        %s291 = smul.addr %s290, 256
        %s292 = scalar_lea.vmem [#allocation6], %s291
        // Predicated region
        $region41: #{tpu_custom_call.1} parent=35 // pred_check
          %p293 = pneg %p86
        $region42: #{tpu_custom_call.1} parent=35 // pred_check_branch
          %295 = sbr.rel (%p293) target = $region44
        $region43: #{tpu_custom_call.1} parent=35 // pred_region
          %296 = dma.done %s289, 4096
        $region44: #{tpu_custom_call.1} parent=35 // pred_fallthru
          _
        %s297 = sand.u32 %s27, 1
        %s298 = scalar_lea.sflag [#allocation7], %s297
        %s299 = sand.u32 %s101, 1
        %s300 = smul.addr %s299, 256
        %s301 = scalar_lea.vmem [#allocation8], %s300
        // Predicated region
        $region45: #{tpu_custom_call.1} parent=35 // pred_check
          %p302 = pneg %p114
        $region46: #{tpu_custom_call.1} parent=35 // pred_check_branch
          %304 = sbr.rel (%p302) target = $region48
        $region47: #{tpu_custom_call.1} parent=35 // pred_region
          %305 = dma.done %s298, 4096
        $region48: #{tpu_custom_call.1} parent=35 // pred_fallthru
          _
        %s306 = sand.u32 %s127, 1
        %s307 = scalar_lea.sflag [#allocation10], %s306
        %s308 = sand.u32 %s127, 1
        %s309 = smul.addr %s308, 256
        %s310 = scalar_lea.vmem [#allocation9], %s309
        // Predicated region
        $region49: #{tpu_custom_call.1} parent=35 // pred_check
          %p311 = pneg %p140
        $region50: #{tpu_custom_call.1} parent=35 // pred_check_branch
          %313 = sbr.rel (%p311) target = $region52
        $region51: #{tpu_custom_call.1} parent=35 // pred_region
          %314 = dma.done %s307, 4096
        $region52: #{tpu_custom_call.1} parent=35 // pred_fallthru
          _
        %s315 = sand.u32 %s47, 1
        %s316 = scalar_lea.sflag [#allocation4], %s315
        %s317 = sand.u32 %s47, 1
        %s318 = smul.addr %s317, 128
        %s319 = scalar_lea.vmem [#allocation3], %s318
        %p320 = pneg %p60
        %p321 = pneg %p57
        %s322 = sand.u32 %s27, 1
        %s323 = scalar_lea.sflag [#allocation7], %s322
        %s324 = sand.u32 %s73, 1
        %s325 = smul.addr %s324, 256
        %s326 = scalar_lea.vmem [#allocation6], %s325
        %p327 = pneg %p86
        %p328 = pneg %p83
        %s329 = sand.u32 %s27, 1
        %s330 = scalar_lea.sflag [#allocation7], %s329
        %s331 = sand.u32 %s101, 1
        %s332 = smul.addr %s331, 256
        %s333 = scalar_lea.vmem [#allocation8], %s332
        %p334 = pneg %p114
        %p335 = pneg %p111
        %s336 = sand.u32 %s127, 1
        %s337 = scalar_lea.sflag [#allocation10], %s336
        %s338 = sand.u32 %s127, 1
        %s339 = smul.addr %s338, 256
        %s340 = scalar_lea.vmem [#allocation9], %s339
        %p341 = pneg %p140
        %p342 = pneg %p137
        %p343 = pneg %p166
        %p344 = pneg %p163
        %s345 = sand.u32 %s153, 1
        %s346 = scalar_lea.sflag [#allocation5], %s345
        %s347 = sand.u32 %s153, 1
        %s348 = smul.addr %s347, 128
        %s349 = scalar_lea.vmem [#allocation11], %s348
        %s350 = smul.u32 16, %s31
        %s351 = smul.u32 2, %s32
        %s352 = sadd.s32 %s32, 2
        %s353 = smul.u32 2, %s352
        %s354 = smul.u32 32, %s32
        %s355 = smul.u32 16, %s31
        %p356 = scmp.eq.s32.totalorder %s32, 0
        // Predicated region
        $region53: #{tpu_custom_call.1} parent=35 // pred_check
          %p357 = pneg %p356
        $region54: #{tpu_custom_call.1} parent=35 // pred_check_branch
          %359 = sbr.rel (%p357) target = $region56
        $region55: #{tpu_custom_call.1} parent=35 // pred_region
          %360 = vst [vmem:[#allocation2] sm:$0xff] 0.0
          %361 = vst [vmem:[#allocation2 + $0x8] sm:$0xff] 0.0
          %362 = vst [vmem:[#allocation2 + $0x10] sm:$0xff] 0.0
          %363 = vst [vmem:[#allocation2 + $0x18] sm:$0xff] 0.0
          %364 = vst [vmem:[#allocation2 + $0x20] sm:$0xff] 0.0
          %365 = vst [vmem:[#allocation2 + $0x28] sm:$0xff] 0.0
          %366 = vst [vmem:[#allocation2 + $0x30] sm:$0xff] 0.0
          %367 = vst [vmem:[#allocation2 + $0x38] sm:$0xff] 0.0
          %368 = vst [vmem:[#allocation2 + $0x40] sm:$0xff] 0.0
          %369 = vst [vmem:[#allocation2 + $0x48] sm:$0xff] 0.0
          %370 = vst [vmem:[#allocation2 + $0x50] sm:$0xff] 0.0
          %371 = vst [vmem:[#allocation2 + $0x58] sm:$0xff] 0.0
          %372 = vst [vmem:[#allocation2 + $0x60] sm:$0xff] 0.0
          %373 = vst [vmem:[#allocation2 + $0x68] sm:$0xff] 0.0
          %374 = vst [vmem:[#allocation2 + $0x70] sm:$0xff] 0.0
          %375 = vst [vmem:[#allocation2 + $0x78] sm:$0xff] 0.0
          %376 = vst [vmem:[#allocation2 + $0x80] sm:$0xff] 0.0
          %377 = vst [vmem:[#allocation2 + $0x88] sm:$0xff] 0.0
          %378 = vst [vmem:[#allocation2 + $0x90] sm:$0xff] 0.0
          %379 = vst [vmem:[#allocation2 + $0x98] sm:$0xff] 0.0
          %380 = vst [vmem:[#allocation2 + $0xa0] sm:$0xff] 0.0
          %381 = vst [vmem:[#allocation2 + $0xa8] sm:$0xff] 0.0
          %382 = vst [vmem:[#allocation2 + $0xb0] sm:$0xff] 0.0
          %383 = vst [vmem:[#allocation2 + $0xb8] sm:$0xff] 0.0
          %384 = vst [vmem:[#allocation2 + $0xc0] sm:$0xff] 0.0
          %385 = vst [vmem:[#allocation2 + $0xc8] sm:$0xff] 0.0
          %386 = vst [vmem:[#allocation2 + $0xd0] sm:$0xff] 0.0
          %387 = vst [vmem:[#allocation2 + $0xd8] sm:$0xff] 0.0
          %388 = vst [vmem:[#allocation2 + $0xe0] sm:$0xff] 0.0
          %389 = vst [vmem:[#allocation2 + $0xe8] sm:$0xff] 0.0
          %390 = vst [vmem:[#allocation2 + $0xf0] sm:$0xff] 0.0
          %391 = vst [vmem:[#allocation2 + $0xf8] sm:$0xff] 0.0
        $region56: #{tpu_custom_call.1} parent=35 // pred_fallthru
          _
        %v392 = vld [vmem:[%s283] sm:$0xff]
        %v393 = vld [vmem:[%s283 + $0x8] sm:$0xff]
        %v394 = vld [vmem:[%s283 + $0x10] sm:$0xff]
        %v395 = vld [vmem:[%s283 + $0x18] sm:$0xff]
        %v396 = vld [vmem:[%s283 + $0x20] sm:$0xff]
        %v397 = vld [vmem:[%s283 + $0x28] sm:$0xff]
        %v398 = vld [vmem:[%s283 + $0x30] sm:$0xff]
        %v399 = vld [vmem:[%s283 + $0x38] sm:$0xff]
        %v400 = vld [vmem:[%s283 + $0x40] sm:$0xff]
        %v401 = vld [vmem:[%s283 + $0x48] sm:$0xff]
        %v402 = vld [vmem:[%s283 + $0x50] sm:$0xff]
        %v403 = vld [vmem:[%s283 + $0x58] sm:$0xff]
        %v404 = vld [vmem:[%s283 + $0x60] sm:$0xff]
        %v405 = vld [vmem:[%s283 + $0x68] sm:$0xff]
        %v406 = vld [vmem:[%s283 + $0x70] sm:$0xff]
        %v407 = vld [vmem:[%s283 + $0x78] sm:$0xff]
        %v408 = vld [vmem:[%s292] sm:$0xff]
        %v409 = vld [vmem:[%s292 + $0x8] sm:$0xff]
        %v410 = vld [vmem:[%s292 + $0x10] sm:$0xff]
        %v411 = vld [vmem:[%s292 + $0x18] sm:$0xff]
        %v412 = vld [vmem:[%s292 + $0x20] sm:$0xff]
        %v413 = vld [vmem:[%s292 + $0x28] sm:$0xff]
        %v414 = vld [vmem:[%s292 + $0x30] sm:$0xff]
        %v415 = vld [vmem:[%s292 + $0x38] sm:$0xff]
        %v416 = vld [vmem:[%s292 + $0x40] sm:$0xff]
        %v417 = vld [vmem:[%s292 + $0x48] sm:$0xff]
        %v418 = vld [vmem:[%s292 + $0x50] sm:$0xff]
        %v419 = vld [vmem:[%s292 + $0x58] sm:$0xff]
        %v420 = vld [vmem:[%s292 + $0x60] sm:$0xff]
        %v421 = vld [vmem:[%s292 + $0x68] sm:$0xff]
        %v422 = vld [vmem:[%s292 + $0x70] sm:$0xff]
        %v423 = vld [vmem:[%s292 + $0x78] sm:$0xff]
        %v424 = vld [vmem:[%s292 + $0x80] sm:$0xff]
        %v425 = vld [vmem:[%s292 + $0x88] sm:$0xff]
        %v426 = vld [vmem:[%s292 + $0x90] sm:$0xff]
        %v427 = vld [vmem:[%s292 + $0x98] sm:$0xff]
        %v428 = vld [vmem:[%s292 + $0xa0] sm:$0xff]
        %v429 = vld [vmem:[%s292 + $0xa8] sm:$0xff]
        %v430 = vld [vmem:[%s292 + $0xb0] sm:$0xff]
        %v431 = vld [vmem:[%s292 + $0xb8] sm:$0xff]
        %v432 = vld [vmem:[%s292 + $0xc0] sm:$0xff]
        %v433 = vld [vmem:[%s292 + $0xc8] sm:$0xff]
        %v434 = vld [vmem:[%s292 + $0xd0] sm:$0xff]
        %v435 = vld [vmem:[%s292 + $0xd8] sm:$0xff]
        %v436 = vld [vmem:[%s292 + $0xe0] sm:$0xff]
        %v437 = vld [vmem:[%s292 + $0xe8] sm:$0xff]
        %v438 = vld [vmem:[%s292 + $0xf0] sm:$0xff]
        %v439 = vld [vmem:[%s292 + $0xf8] sm:$0xff]
        %v456 = vunpack.c.l.b16 %v392
        %v457 = vunpack.c.h.b16 %v392
        %v458 = vunpack.c.l.b16 %v393
        %v459 = vunpack.c.h.b16 %v393
        %v460 = vunpack.c.l.b16 %v394
        %v461 = vunpack.c.h.b16 %v394
        %v462 = vunpack.c.l.b16 %v395
        %v463 = vunpack.c.h.b16 %v395
        %v464 = vunpack.c.l.b16 %v396
        %v465 = vunpack.c.h.b16 %v396
        %v466 = vunpack.c.l.b16 %v397
        %v467 = vunpack.c.h.b16 %v397
        %v468 = vunpack.c.l.b16 %v398
        %v469 = vunpack.c.h.b16 %v398
        %v470 = vunpack.c.l.b16 %v399
        %v471 = vunpack.c.h.b16 %v399
        %v472 = vunpack.c.l.b16 %v400
        %v473 = vunpack.c.h.b16 %v400
        %v474 = vunpack.c.l.b16 %v401
        %v475 = vunpack.c.h.b16 %v401
        %v476 = vunpack.c.l.b16 %v402
        %v477 = vunpack.c.h.b16 %v402
        %v478 = vunpack.c.l.b16 %v403
        %v479 = vunpack.c.h.b16 %v403
        %v480 = vunpack.c.l.b16 %v404
        %v481 = vunpack.c.h.b16 %v404
        %v482 = vunpack.c.l.b16 %v405
        %v483 = vunpack.c.h.b16 %v405
        %v484 = vunpack.c.l.b16 %v406
        %v485 = vunpack.c.h.b16 %v406
        %v486 = vunpack.c.l.b16 %v407
        %v487 = vunpack.c.h.b16 %v407
        %v488 = vpack.c.b16 %v458, %v456
        %v489 = vpack.c.b16 %v459, %v457
        %v490 = vpack.c.b16 %v462, %v460
        %v491 = vpack.c.b16 %v463, %v461
        %v492 = vpack.c.b16 %v466, %v464
        %v493 = vpack.c.b16 %v467, %v465
        %v494 = vpack.c.b16 %v470, %v468
        %v495 = vpack.c.b16 %v471, %v469
        %v496 = vpack.c.b16 %v474, %v472
        %v497 = vpack.c.b16 %v475, %v473
        %v498 = vpack.c.b16 %v478, %v476
        %v499 = vpack.c.b16 %v479, %v477
        %v500 = vpack.c.b16 %v482, %v480
        %v501 = vpack.c.b16 %v483, %v481
        %v502 = vpack.c.b16 %v486, %v484
        %v503 = vpack.c.b16 %v487, %v485
        %v552 = vunpack.c.l.b16 %v408
        %v553 = vunpack.c.h.b16 %v408
        %v554 = vunpack.c.l.b16 %v409
        %v555 = vunpack.c.h.b16 %v409
        %v556 = vunpack.c.l.b16 %v410
        %v557 = vunpack.c.h.b16 %v410
        %v558 = vunpack.c.l.b16 %v411
        %v559 = vunpack.c.h.b16 %v411
        %v560 = vunpack.c.l.b16 %v412
        %v561 = vunpack.c.h.b16 %v412
        %v562 = vunpack.c.l.b16 %v413
        %v563 = vunpack.c.h.b16 %v413
        %v564 = vunpack.c.l.b16 %v414
        %v565 = vunpack.c.h.b16 %v414
        %v566 = vunpack.c.l.b16 %v415
        %v567 = vunpack.c.h.b16 %v415
        %v568 = vunpack.c.l.b16 %v416
        %v569 = vunpack.c.h.b16 %v416
        %v570 = vunpack.c.l.b16 %v417
        %v571 = vunpack.c.h.b16 %v417
        %v572 = vunpack.c.l.b16 %v418
        %v573 = vunpack.c.h.b16 %v418
        %v574 = vunpack.c.l.b16 %v419
        %v575 = vunpack.c.h.b16 %v419
        %v576 = vunpack.c.l.b16 %v420
        %v577 = vunpack.c.h.b16 %v420
        %v578 = vunpack.c.l.b16 %v421
        %v579 = vunpack.c.h.b16 %v421
        %v580 = vunpack.c.l.b16 %v422
        %v581 = vunpack.c.h.b16 %v422
        %v582 = vunpack.c.l.b16 %v423
        %v583 = vunpack.c.h.b16 %v423
        %v584 = vunpack.c.l.b16 %v424
        %v585 = vunpack.c.h.b16 %v424
        %v586 = vunpack.c.l.b16 %v425
        %v587 = vunpack.c.h.b16 %v425
        %v588 = vunpack.c.l.b16 %v426
        %v589 = vunpack.c.h.b16 %v426
        %v590 = vunpack.c.l.b16 %v427
        %v591 = vunpack.c.h.b16 %v427
        %v592 = vunpack.c.l.b16 %v428
        %v593 = vunpack.c.h.b16 %v428
        %v594 = vunpack.c.l.b16 %v429
        %v595 = vunpack.c.h.b16 %v429
        %v596 = vunpack.c.l.b16 %v430
        %v597 = vunpack.c.h.b16 %v430
        %v598 = vunpack.c.l.b16 %v431
        %v599 = vunpack.c.h.b16 %v431
        %v600 = vunpack.c.l.b16 %v432
        %v601 = vunpack.c.h.b16 %v432
        %v602 = vunpack.c.l.b16 %v433
        %v603 = vunpack.c.h.b16 %v433
        %v604 = vunpack.c.l.b16 %v434
        %v605 = vunpack.c.h.b16 %v434
        %v606 = vunpack.c.l.b16 %v435
        %v607 = vunpack.c.h.b16 %v435
        %v608 = vunpack.c.l.b16 %v436
        %v609 = vunpack.c.h.b16 %v436
        %v610 = vunpack.c.l.b16 %v437
        %v611 = vunpack.c.h.b16 %v437
        %v612 = vunpack.c.l.b16 %v438
        %v613 = vunpack.c.h.b16 %v438
        %v614 = vunpack.c.l.b16 %v439
        %v615 = vunpack.c.h.b16 %v439
        %v616 = vpack.c.b16 %v554, %v552
        %v617 = vpack.c.b16 %v555, %v553
        %v618 = vpack.c.b16 %v558, %v556
        %v619 = vpack.c.b16 %v559, %v557
        %v620 = vpack.c.b16 %v562, %v560
        %v621 = vpack.c.b16 %v563, %v561
        %v622 = vpack.c.b16 %v566, %v564
        %v623 = vpack.c.b16 %v567, %v565
        %v624 = vpack.c.b16 %v570, %v568
        %v625 = vpack.c.b16 %v571, %v569
        %v626 = vpack.c.b16 %v574, %v572
        %v627 = vpack.c.b16 %v575, %v573
        %v628 = vpack.c.b16 %v578, %v576
        %v629 = vpack.c.b16 %v579, %v577
        %v630 = vpack.c.b16 %v582, %v580
        %v631 = vpack.c.b16 %v583, %v581
        %v632 = vpack.c.b16 %v586, %v584
        %v633 = vpack.c.b16 %v587, %v585
        %v634 = vpack.c.b16 %v590, %v588
        %v635 = vpack.c.b16 %v591, %v589
        %v636 = vpack.c.b16 %v594, %v592
        %v637 = vpack.c.b16 %v595, %v593
        %v638 = vpack.c.b16 %v598, %v596
        %v639 = vpack.c.b16 %v599, %v597
        %v640 = vpack.c.b16 %v602, %v600
        %v641 = vpack.c.b16 %v603, %v601
        %v642 = vpack.c.b16 %v606, %v604
        %v643 = vpack.c.b16 %v607, %v605
        %v644 = vpack.c.b16 %v610, %v608
        %v645 = vpack.c.b16 %v611, %v609
        %v646 = vpack.c.b16 %v614, %v612
        %v647 = vpack.c.b16 %v615, %v613
        %680 = vmatprep.subr.bf16.mxu0 %v617
        %681 = vmatpush1.bf16.msra.mxu0 %v616
        %682 = vmatprep.subr.bf16.mxu0 %v619
        %683 = vmatpush1.bf16.msra.mxu0 %v618
        %684 = vmatprep.subr.bf16.mxu0 %v621
        %685 = vmatpush1.bf16.msra.mxu0 %v620
        %686 = vmatprep.subr.bf16.mxu0 %v623
        %687 = vmatpush1.bf16.msra.mxu0 %v622
        %688 = vmatprep.subr.bf16.mxu0 %v625
        %689 = vmatpush1.bf16.msra.mxu0 %v624
        %690 = vmatprep.subr.bf16.mxu0 %v627
        %691 = vmatpush1.bf16.msra.mxu0 %v626
        %692 = vmatprep.subr.bf16.mxu0 %v629
        %693 = vmatpush1.bf16.msra.mxu0 %v628
        %694 = vmatprep.subr.bf16.mxu0 %v631
        %695 = vmatpush1.bf16.msra.mxu0 %v630
        %696 = vmatprep.subr.bf16.mxu0 %v633
        %697 = vmatpush1.bf16.msra.mxu0 %v632
        %698 = vmatprep.subr.bf16.mxu0 %v635
        %699 = vmatpush1.bf16.msra.mxu0 %v634
        %700 = vmatprep.subr.bf16.mxu0 %v637
        %701 = vmatpush1.bf16.msra.mxu0 %v636
        %702 = vmatprep.subr.bf16.mxu0 %v639
        %703 = vmatpush1.bf16.msra.mxu0 %v638
        %704 = vmatprep.subr.bf16.mxu0 %v641
        %705 = vmatpush1.bf16.msra.mxu0 %v640
        %706 = vmatprep.subr.bf16.mxu0 %v643
        %707 = vmatpush1.bf16.msra.mxu0 %v642
        %708 = vmatprep.subr.bf16.mxu0 %v645
        %709 = vmatpush1.bf16.msra.mxu0 %v644
        %710 = vmatprep.subr.bf16.mxu0 %v647
        %711 = vmatpush1.bf16.msra.mxu0 %v646
        %712 = vmatprep.mubr.bf16.mxu0 %v489
        %713 = vmatmul.mubr.bf16.gmra.mrb[0].mxu0 %v488
        %v714 = vpop.f32.mrb[0].mxu0
        %v715 = vadd.f32 0.0, %v714
        %v716 = vpop.f32.mrb[0].mxu0
        %v717 = vadd.f32 0.0, %v716
        %v718 = vpop.f32.mrb[0].mxu0
        %v719 = vadd.f32 0.0, %v718
        %v720 = vpop.f32.mrb[0].mxu0
        %v721 = vadd.f32 0.0, %v720
        %722 = vmatprep.mubr.bf16.mxu0 %v491
        %723 = vmatmul.mubr.bf16.gmra.mrb[0].mxu0 %v490
        %v724 = vpop.f32.mrb[0].mxu0
        %v725 = vadd.f32 0.0, %v724
        %v726 = vpop.f32.mrb[0].mxu0
        %v727 = vadd.f32 0.0, %v726
        %v728 = vpop.f32.mrb[0].mxu0
        %v729 = vadd.f32 0.0, %v728
        %v730 = vpop.f32.mrb[0].mxu0
        %v731 = vadd.f32 0.0, %v730
        %732 = vmatprep.mubr.bf16.mxu0 %v493
        %733 = vmatmul.mubr.bf16.gmra.mrb[0].mxu0 %v492
        %v734 = vpop.f32.mrb[0].mxu0
        %v735 = vadd.f32 0.0, %v734
        %v736 = vpop.f32.mrb[0].mxu0
        %v737 = vadd.f32 0.0, %v736
        %v738 = vpop.f32.mrb[0].mxu0
        %v739 = vadd.f32 0.0, %v738
        %v740 = vpop.f32.mrb[0].mxu0
        %v741 = vadd.f32 0.0, %v740
        %742 = vmatprep.mubr.bf16.mxu0 %v495
        %743 = vmatmul.mubr.bf16.gmra.mrb[0].mxu0 %v494
        %v744 = vpop.f32.mrb[0].mxu0
        %v745 = vadd.f32 0.0, %v744
        %v746 = vpop.f32.mrb[0].mxu0
        %v747 = vadd.f32 0.0, %v746
        %v748 = vpop.f32.mrb[0].mxu0
        %v749 = vadd.f32 0.0, %v748
        %v750 = vpop.f32.mrb[0].mxu0
        %v751 = vadd.f32 0.0, %v750
        %752 = vmatprep.mubr.bf16.mxu0 %v497
        %753 = vmatmul.mubr.bf16.gmra.mrb[0].mxu0 %v496
        %v754 = vpop.f32.mrb[0].mxu0
        %v755 = vadd.f32 0.0, %v754
        %v756 = vpop.f32.mrb[0].mxu0
        %v757 = vadd.f32 0.0, %v756
        %v758 = vpop.f32.mrb[0].mxu0
        %v759 = vadd.f32 0.0, %v758
        %v760 = vpop.f32.mrb[0].mxu0
        %v761 = vadd.f32 0.0, %v760
        %762 = vmatprep.mubr.bf16.mxu0 %v499
        %763 = vmatmul.mubr.bf16.gmra.mrb[0].mxu0 %v498
        %v764 = vpop.f32.mrb[0].mxu0
        %v765 = vadd.f32 0.0, %v764
        %v766 = vpop.f32.mrb[0].mxu0
        %v767 = vadd.f32 0.0, %v766
        %v768 = vpop.f32.mrb[0].mxu0
        %v769 = vadd.f32 0.0, %v768
        %v770 = vpop.f32.mrb[0].mxu0
        %v771 = vadd.f32 0.0, %v770
        %772 = vmatprep.mubr.bf16.mxu0 %v501
        %773 = vmatmul.mubr.bf16.gmra.mrb[0].mxu0 %v500
        %v774 = vpop.f32.mrb[0].mxu0
        %v775 = vadd.f32 0.0, %v774
        %v776 = vpop.f32.mrb[0].mxu0
        %v777 = vadd.f32 0.0, %v776
        %v778 = vpop.f32.mrb[0].mxu0
        %v779 = vadd.f32 0.0, %v778
        %v780 = vpop.f32.mrb[0].mxu0
        %v781 = vadd.f32 0.0, %v780
        %782 = vmatprep.mubr.bf16.mxu0 %v503
        %783 = vmatmul.mubr.bf16.gmra.mrb[0].mxu0 %v502
        %v784 = vpop.f32.mrb[0].mxu0
        %v785 = vadd.f32 0.0, %v784
        %v786 = vpop.f32.mrb[0].mxu0
        %v787 = vadd.f32 0.0, %v786
        %v788 = vpop.f32.mrb[0].mxu0
        %v789 = vadd.f32 0.0, %v788
        %v790 = vpop.f32.mrb[0].mxu0
        %v791 = vadd.f32 0.0, %v790
        %792 = vdwg.mxu0
        %v793 = vld [vmem:[%s301] sm:$0xff]
        %v794 = vld [vmem:[%s301 + $0x8] sm:$0xff]
        %v795 = vld [vmem:[%s301 + $0x10] sm:$0xff]
        %v796 = vld [vmem:[%s301 + $0x18] sm:$0xff]
        %v797 = vld [vmem:[%s301 + $0x20] sm:$0xff]
        %v798 = vld [vmem:[%s301 + $0x28] sm:$0xff]
        %v799 = vld [vmem:[%s301 + $0x30] sm:$0xff]
        %v800 = vld [vmem:[%s301 + $0x38] sm:$0xff]
        %v801 = vld [vmem:[%s301 + $0x40] sm:$0xff]
        %v802 = vld [vmem:[%s301 + $0x48] sm:$0xff]
        %v803 = vld [vmem:[%s301 + $0x50] sm:$0xff]
        %v804 = vld [vmem:[%s301 + $0x58] sm:$0xff]
        %v805 = vld [vmem:[%s301 + $0x60] sm:$0xff]
        %v806 = vld [vmem:[%s301 + $0x68] sm:$0xff]
        %v807 = vld [vmem:[%s301 + $0x70] sm:$0xff]
        %v808 = vld [vmem:[%s301 + $0x78] sm:$0xff]
        %v809 = vld [vmem:[%s301 + $0x80] sm:$0xff]
        %v810 = vld [vmem:[%s301 + $0x88] sm:$0xff]
        %v811 = vld [vmem:[%s301 + $0x90] sm:$0xff]
        %v812 = vld [vmem:[%s301 + $0x98] sm:$0xff]
        %v813 = vld [vmem:[%s301 + $0xa0] sm:$0xff]
        %v814 = vld [vmem:[%s301 + $0xa8] sm:$0xff]
        %v815 = vld [vmem:[%s301 + $0xb0] sm:$0xff]
        %v816 = vld [vmem:[%s301 + $0xb8] sm:$0xff]
        %v817 = vld [vmem:[%s301 + $0xc0] sm:$0xff]
        %v818 = vld [vmem:[%s301 + $0xc8] sm:$0xff]
        %v819 = vld [vmem:[%s301 + $0xd0] sm:$0xff]
        %v820 = vld [vmem:[%s301 + $0xd8] sm:$0xff]
        %v821 = vld [vmem:[%s301 + $0xe0] sm:$0xff]
        %v822 = vld [vmem:[%s301 + $0xe8] sm:$0xff]
        %v823 = vld [vmem:[%s301 + $0xf0] sm:$0xff]
        %v824 = vld [vmem:[%s301 + $0xf8] sm:$0xff]
        %v857 = vunpack.c.l.b16 %v793
        %v858 = vunpack.c.h.b16 %v793
        %v859 = vunpack.c.l.b16 %v794
        %v860 = vunpack.c.h.b16 %v794
        %v861 = vunpack.c.l.b16 %v795
        %v862 = vunpack.c.h.b16 %v795
        %v863 = vunpack.c.l.b16 %v796
        %v864 = vunpack.c.h.b16 %v796
        %v865 = vunpack.c.l.b16 %v797
        %v866 = vunpack.c.h.b16 %v797
        %v867 = vunpack.c.l.b16 %v798
        %v868 = vunpack.c.h.b16 %v798
        %v869 = vunpack.c.l.b16 %v799
        %v870 = vunpack.c.h.b16 %v799
        %v871 = vunpack.c.l.b16 %v800
        %v872 = vunpack.c.h.b16 %v800
        %v873 = vunpack.c.l.b16 %v801
        %v874 = vunpack.c.h.b16 %v801
        %v875 = vunpack.c.l.b16 %v802
        %v876 = vunpack.c.h.b16 %v802
        %v877 = vunpack.c.l.b16 %v803
        %v878 = vunpack.c.h.b16 %v803
        %v879 = vunpack.c.l.b16 %v804
        %v880 = vunpack.c.h.b16 %v804
        %v881 = vunpack.c.l.b16 %v805
        %v882 = vunpack.c.h.b16 %v805
        %v883 = vunpack.c.l.b16 %v806
        %v884 = vunpack.c.h.b16 %v806
        %v885 = vunpack.c.l.b16 %v807
        %v886 = vunpack.c.h.b16 %v807
        %v887 = vunpack.c.l.b16 %v808
        %v888 = vunpack.c.h.b16 %v808
        %v889 = vunpack.c.l.b16 %v809
        %v890 = vunpack.c.h.b16 %v809
        %v891 = vunpack.c.l.b16 %v810
        %v892 = vunpack.c.h.b16 %v810
        %v893 = vunpack.c.l.b16 %v811
        %v894 = vunpack.c.h.b16 %v811
        %v895 = vunpack.c.l.b16 %v812
        %v896 = vunpack.c.h.b16 %v812
        %v897 = vunpack.c.l.b16 %v813
        %v898 = vunpack.c.h.b16 %v813
        %v899 = vunpack.c.l.b16 %v814
        %v900 = vunpack.c.h.b16 %v814
        %v901 = vunpack.c.l.b16 %v815
        %v902 = vunpack.c.h.b16 %v815
        %v903 = vunpack.c.l.b16 %v816
        %v904 = vunpack.c.h.b16 %v816
        %v905 = vunpack.c.l.b16 %v817
        %v906 = vunpack.c.h.b16 %v817
        %v907 = vunpack.c.l.b16 %v818
        %v908 = vunpack.c.h.b16 %v818
        %v909 = vunpack.c.l.b16 %v819
        %v910 = vunpack.c.h.b16 %v819
        %v911 = vunpack.c.l.b16 %v820
        %v912 = vunpack.c.h.b16 %v820
        %v913 = vunpack.c.l.b16 %v821
        %v914 = vunpack.c.h.b16 %v821
        %v915 = vunpack.c.l.b16 %v822
        %v916 = vunpack.c.h.b16 %v822
        %v917 = vunpack.c.l.b16 %v823
        %v918 = vunpack.c.h.b16 %v823
        %v919 = vunpack.c.l.b16 %v824
        %v920 = vunpack.c.h.b16 %v824
        %v921 = vpack.c.b16 %v859, %v857
        %v922 = vpack.c.b16 %v860, %v858
        %v923 = vpack.c.b16 %v863, %v861
        %v924 = vpack.c.b16 %v864, %v862
        %v925 = vpack.c.b16 %v867, %v865
        %v926 = vpack.c.b16 %v868, %v866
        %v927 = vpack.c.b16 %v871, %v869
        %v928 = vpack.c.b16 %v872, %v870
        %v929 = vpack.c.b16 %v875, %v873
        %v930 = vpack.c.b16 %v876, %v874
        %v931 = vpack.c.b16 %v879, %v877
        %v932 = vpack.c.b16 %v880, %v878
        %v933 = vpack.c.b16 %v883, %v881
        %v934 = vpack.c.b16 %v884, %v882
        %v935 = vpack.c.b16 %v887, %v885
        %v936 = vpack.c.b16 %v888, %v886
        %v937 = vpack.c.b16 %v891, %v889
        %v938 = vpack.c.b16 %v892, %v890
        %v939 = vpack.c.b16 %v895, %v893
        %v940 = vpack.c.b16 %v896, %v894
        %v941 = vpack.c.b16 %v899, %v897
        %v942 = vpack.c.b16 %v900, %v898
        %v943 = vpack.c.b16 %v903, %v901
        %v944 = vpack.c.b16 %v904, %v902
        %v945 = vpack.c.b16 %v907, %v905
        %v946 = vpack.c.b16 %v908, %v906
        %v947 = vpack.c.b16 %v911, %v909
        %v948 = vpack.c.b16 %v912, %v910
        %v949 = vpack.c.b16 %v915, %v913
        %v950 = vpack.c.b16 %v916, %v914
        %v951 = vpack.c.b16 %v919, %v917
        %v952 = vpack.c.b16 %v920, %v918
        %985 = vmatprep.subr.bf16.mxu0 %v922
        %986 = vmatpush1.bf16.msra.mxu0 %v921
        %987 = vmatprep.subr.bf16.mxu0 %v924
        %988 = vmatpush1.bf16.msra.mxu0 %v923
        %989 = vmatprep.subr.bf16.mxu0 %v926
        %990 = vmatpush1.bf16.msra.mxu0 %v925
        %991 = vmatprep.subr.bf16.mxu0 %v928
        %992 = vmatpush1.bf16.msra.mxu0 %v927
        %993 = vmatprep.subr.bf16.mxu0 %v930
        %994 = vmatpush1.bf16.msra.mxu0 %v929
        %995 = vmatprep.subr.bf16.mxu0 %v932
        %996 = vmatpush1.bf16.msra.mxu0 %v931
        %997 = vmatprep.subr.bf16.mxu0 %v934
        %998 = vmatpush1.bf16.msra.mxu0 %v933
        %999 = vmatprep.subr.bf16.mxu0 %v936
        %1000 = vmatpush1.bf16.msra.mxu0 %v935
        %1001 = vmatprep.subr.bf16.mxu0 %v938
        %1002 = vmatpush1.bf16.msra.mxu0 %v937
        %1003 = vmatprep.subr.bf16.mxu0 %v940
        %1004 = vmatpush1.bf16.msra.mxu0 %v939
        %1005 = vmatprep.subr.bf16.mxu0 %v942
        %1006 = vmatpush1.bf16.msra.mxu0 %v941
        %1007 = vmatprep.subr.bf16.mxu0 %v944
        %1008 = vmatpush1.bf16.msra.mxu0 %v943
        %1009 = vmatprep.subr.bf16.mxu0 %v946
        %1010 = vmatpush1.bf16.msra.mxu0 %v945
        %1011 = vmatprep.subr.bf16.mxu0 %v948
        %1012 = vmatpush1.bf16.msra.mxu0 %v947
        %1013 = vmatprep.subr.bf16.mxu0 %v950
        %1014 = vmatpush1.bf16.msra.mxu0 %v949
        %1015 = vmatprep.subr.bf16.mxu0 %v952
        %1016 = vmatpush1.bf16.msra.mxu0 %v951
        %1017 = vmatprep.mubr.bf16.mxu0 %v489
        %1018 = vmatmul.mubr.bf16.gmra.mrb[0].mxu0 %v488
        %v1019 = vpop.f32.mrb[0].mxu0
        %v1020 = vadd.f32 0.0, %v1019
        %v1021 = vpop.f32.mrb[0].mxu0
        %v1022 = vadd.f32 0.0, %v1021
        %v1023 = vpop.f32.mrb[0].mxu0
        %v1024 = vadd.f32 0.0, %v1023
        %v1025 = vpop.f32.mrb[0].mxu0
        %v1026 = vadd.f32 0.0, %v1025
        %1027 = vmatprep.mubr.bf16.mxu0 %v491
        %1028 = vmatmul.mubr.bf16.gmra.mrb[0].mxu0 %v490
        %v1029 = vpop.f32.mrb[0].mxu0
        %v1030 = vadd.f32 0.0, %v1029
        %v1031 = vpop.f32.mrb[0].mxu0
        %v1032 = vadd.f32 0.0, %v1031
        %v1033 = vpop.f32.mrb[0].mxu0
        %v1034 = vadd.f32 0.0, %v1033
        %v1035 = vpop.f32.mrb[0].mxu0
        %v1036 = vadd.f32 0.0, %v1035
        %1037 = vmatprep.mubr.bf16.mxu0 %v493
        %1038 = vmatmul.mubr.bf16.gmra.mrb[0].mxu0 %v492
        %v1039 = vpop.f32.mrb[0].mxu0
        %v1040 = vadd.f32 0.0, %v1039
        %v1041 = vpop.f32.mrb[0].mxu0
        %v1042 = vadd.f32 0.0, %v1041
        %v1043 = vpop.f32.mrb[0].mxu0
        %v1044 = vadd.f32 0.0, %v1043
        %v1045 = vpop.f32.mrb[0].mxu0
        %v1046 = vadd.f32 0.0, %v1045
        %1047 = vmatprep.mubr.bf16.mxu0 %v495
        %1048 = vmatmul.mubr.bf16.gmra.mrb[0].mxu0 %v494
        %v1049 = vpop.f32.mrb[0].mxu0
        %v1050 = vadd.f32 0.0, %v1049
        %v1051 = vpop.f32.mrb[0].mxu0
        %v1052 = vadd.f32 0.0, %v1051
        %v1053 = vpop.f32.mrb[0].mxu0
        %v1054 = vadd.f32 0.0, %v1053
        %v1055 = vpop.f32.mrb[0].mxu0
        %v1056 = vadd.f32 0.0, %v1055
        %1057 = vmatprep.mubr.bf16.mxu0 %v497
        %1058 = vmatmul.mubr.bf16.gmra.mrb[0].mxu0 %v496
        %v1059 = vpop.f32.mrb[0].mxu0
        %v1060 = vadd.f32 0.0, %v1059
        %v1061 = vpop.f32.mrb[0].mxu0
        %v1062 = vadd.f32 0.0, %v1061
        %v1063 = vpop.f32.mrb[0].mxu0
        %v1064 = vadd.f32 0.0, %v1063
        %v1065 = vpop.f32.mrb[0].mxu0
        %v1066 = vadd.f32 0.0, %v1065
        %1067 = vmatprep.mubr.bf16.mxu0 %v499
        %1068 = vmatmul.mubr.bf16.gmra.mrb[0].mxu0 %v498
        %v1069 = vpop.f32.mrb[0].mxu0
        %v1070 = vadd.f32 0.0, %v1069
        %v1071 = vpop.f32.mrb[0].mxu0
        %v1072 = vadd.f32 0.0, %v1071
        %v1073 = vpop.f32.mrb[0].mxu0
        %v1074 = vadd.f32 0.0, %v1073
        %v1075 = vpop.f32.mrb[0].mxu0
        %v1076 = vadd.f32 0.0, %v1075
        %1077 = vmatprep.mubr.bf16.mxu0 %v501
        %1078 = vmatmul.mubr.bf16.gmra.mrb[0].mxu0 %v500
        %v1079 = vpop.f32.mrb[0].mxu0
        %v1080 = vadd.f32 0.0, %v1079
        %v1081 = vpop.f32.mrb[0].mxu0
        %v1082 = vadd.f32 0.0, %v1081
        %v1083 = vpop.f32.mrb[0].mxu0
        %v1084 = vadd.f32 0.0, %v1083
        %v1085 = vpop.f32.mrb[0].mxu0
        %v1086 = vadd.f32 0.0, %v1085
        %1087 = vmatprep.mubr.bf16.mxu0 %v503
        %1088 = vmatmul.mubr.bf16.gmra.mrb[0].mxu0 %v502
        %v1089 = vpop.f32.mrb[0].mxu0
        %v1090 = vadd.f32 0.0, %v1089
        %v1091 = vpop.f32.mrb[0].mxu0
        %v1092 = vadd.f32 0.0, %v1091
        %v1093 = vpop.f32.mrb[0].mxu0
        %v1094 = vadd.f32 0.0, %v1093
        %v1095 = vpop.f32.mrb[0].mxu0
        %v1096 = vadd.f32 0.0, %v1095
        %1097 = vdwg.mxu0
        %v1098 = vxor.u32 %v715, 2147483648
        %v1099 = vxor.u32 %v717, 2147483648
        %v1100 = vxor.u32 %v719, 2147483648
        %v1101 = vxor.u32 %v721, 2147483648
        %v1102 = vxor.u32 %v725, 2147483648
        %v1103 = vxor.u32 %v727, 2147483648
        %v1104 = vxor.u32 %v729, 2147483648
        %v1105 = vxor.u32 %v731, 2147483648
        %v1106 = vxor.u32 %v735, 2147483648
        %v1107 = vxor.u32 %v737, 2147483648
        %v1108 = vxor.u32 %v739, 2147483648
        %v1109 = vxor.u32 %v741, 2147483648
        %v1110 = vxor.u32 %v745, 2147483648
        %v1111 = vxor.u32 %v747, 2147483648
        %v1112 = vxor.u32 %v749, 2147483648
        %v1113 = vxor.u32 %v751, 2147483648
        %v1114 = vxor.u32 %v755, 2147483648
        %v1115 = vxor.u32 %v757, 2147483648
        %v1116 = vxor.u32 %v759, 2147483648
        %v1117 = vxor.u32 %v761, 2147483648
        %v1118 = vxor.u32 %v765, 2147483648
        %v1119 = vxor.u32 %v767, 2147483648
        %v1120 = vxor.u32 %v769, 2147483648
        %v1121 = vxor.u32 %v771, 2147483648
        %v1122 = vxor.u32 %v775, 2147483648
        %v1123 = vxor.u32 %v777, 2147483648
        %v1124 = vxor.u32 %v779, 2147483648
        %v1125 = vxor.u32 %v781, 2147483648
        %v1126 = vxor.u32 %v785, 2147483648
        %v1127 = vxor.u32 %v787, 2147483648
        %v1128 = vxor.u32 %v789, 2147483648
        %v1129 = vxor.u32 %v791, 2147483648
        %v1130 = vmul.f32 %v1098, 1.442695
        %v1131 = vpow.pop %v1130
        %v1132 = vmul.f32 %v1099, 1.442695
        %v1133 = vpow.pop %v1132
        %v1134 = vmul.f32 %v1100, 1.442695
        %v1135 = vpow.pop %v1134
        %v1136 = vmul.f32 %v1101, 1.442695
        %v1137 = vpow.pop %v1136
        %v1138 = vmul.f32 %v1102, 1.442695
        %v1139 = vpow.pop %v1138
        %v1140 = vmul.f32 %v1103, 1.442695
        %v1141 = vpow.pop %v1140
        %v1142 = vmul.f32 %v1104, 1.442695
        %v1143 = vpow.pop %v1142
        %v1144 = vmul.f32 %v1105, 1.442695
        %v1145 = vpow.pop %v1144
        %v1146 = vmul.f32 %v1106, 1.442695
        %v1147 = vpow.pop %v1146
        %v1148 = vmul.f32 %v1107, 1.442695
        %v1149 = vpow.pop %v1148
        %v1150 = vmul.f32 %v1108, 1.442695
        %v1151 = vpow.pop %v1150
        %v1152 = vmul.f32 %v1109, 1.442695
        %v1153 = vpow.pop %v1152
        %v1154 = vmul.f32 %v1110, 1.442695
        %v1155 = vpow.pop %v1154
        %v1156 = vmul.f32 %v1111, 1.442695
        %v1157 = vpow.pop %v1156
        %v1158 = vmul.f32 %v1112, 1.442695
        %v1159 = vpow.pop %v1158
        %v1160 = vmul.f32 %v1113, 1.442695
        %v1161 = vpow.pop %v1160
        %v1162 = vmul.f32 %v1114, 1.442695
        %v1163 = vpow.pop %v1162
        %v1164 = vmul.f32 %v1115, 1.442695
        %v1165 = vpow.pop %v1164
        %v1166 = vmul.f32 %v1116, 1.442695
        %v1167 = vpow.pop %v1166
        %v1168 = vmul.f32 %v1117, 1.442695
        %v1169 = vpow.pop %v1168
        %v1170 = vmul.f32 %v1118, 1.442695
        %v1171 = vpow.pop %v1170
        %v1172 = vmul.f32 %v1119, 1.442695
        %v1173 = vpow.pop %v1172
        %v1174 = vmul.f32 %v1120, 1.442695
        %v1175 = vpow.pop %v1174
        %v1176 = vmul.f32 %v1121, 1.442695
        %v1177 = vpow.pop %v1176
        %v1178 = vmul.f32 %v1122, 1.442695
        %v1179 = vpow.pop %v1178
        %v1180 = vmul.f32 %v1123, 1.442695
        %v1181 = vpow.pop %v1180
        %v1182 = vmul.f32 %v1124, 1.442695
        %v1183 = vpow.pop %v1182
        %v1184 = vmul.f32 %v1125, 1.442695
        %v1185 = vpow.pop %v1184
        %v1186 = vmul.f32 %v1126, 1.442695
        %v1187 = vpow.pop %v1186
        %v1188 = vmul.f32 %v1127, 1.442695
        %v1189 = vpow.pop %v1188
        %v1190 = vmul.f32 %v1128, 1.442695
        %v1191 = vpow.pop %v1190
        %v1192 = vmul.f32 %v1129, 1.442695
        %v1193 = vpow.pop %v1192
        %v1194 = vadd.f32 %v1131, 1.0
        %v1195 = vadd.f32 %v1133, 1.0
        %v1196 = vadd.f32 %v1135, 1.0
        %v1197 = vadd.f32 %v1137, 1.0
        %v1198 = vadd.f32 %v1139, 1.0
        %v1199 = vadd.f32 %v1141, 1.0
        %v1200 = vadd.f32 %v1143, 1.0
        %v1201 = vadd.f32 %v1145, 1.0
        %v1202 = vadd.f32 %v1147, 1.0
        %v1203 = vadd.f32 %v1149, 1.0
        %v1204 = vadd.f32 %v1151, 1.0
        %v1205 = vadd.f32 %v1153, 1.0
        %v1206 = vadd.f32 %v1155, 1.0
        %v1207 = vadd.f32 %v1157, 1.0
        %v1208 = vadd.f32 %v1159, 1.0
        %v1209 = vadd.f32 %v1161, 1.0
        %v1210 = vadd.f32 %v1163, 1.0
        %v1211 = vadd.f32 %v1165, 1.0
        %v1212 = vadd.f32 %v1167, 1.0
        %v1213 = vadd.f32 %v1169, 1.0
        %v1214 = vadd.f32 %v1171, 1.0
        %v1215 = vadd.f32 %v1173, 1.0
        %v1216 = vadd.f32 %v1175, 1.0
        %v1217 = vadd.f32 %v1177, 1.0
        %v1218 = vadd.f32 %v1179, 1.0
        %v1219 = vadd.f32 %v1181, 1.0
        %v1220 = vadd.f32 %v1183, 1.0
        %v1221 = vadd.f32 %v1185, 1.0
        %v1222 = vadd.f32 %v1187, 1.0
        %v1223 = vadd.f32 %v1189, 1.0
        %v1224 = vadd.f32 %v1191, 1.0
        %v1225 = vadd.f32 %v1193, 1.0
        %v1226 = vrcp.pop %v1194
        %v1227 = vmul.f32 1.0, %v1226
        %v1228 = vrcp.pop %v1195
        %v1229 = vmul.f32 1.0, %v1228
        %v1230 = vrcp.pop %v1196
        %v1231 = vmul.f32 1.0, %v1230
        %v1232 = vrcp.pop %v1197
        %v1233 = vmul.f32 1.0, %v1232
        %v1234 = vrcp.pop %v1198
        %v1235 = vmul.f32 1.0, %v1234
        %v1236 = vrcp.pop %v1199
        %v1237 = vmul.f32 1.0, %v1236
        %v1238 = vrcp.pop %v1200
        %v1239 = vmul.f32 1.0, %v1238
        %v1240 = vrcp.pop %v1201
        %v1241 = vmul.f32 1.0, %v1240
        %v1242 = vrcp.pop %v1202
        %v1243 = vmul.f32 1.0, %v1242
        %v1244 = vrcp.pop %v1203
        %v1245 = vmul.f32 1.0, %v1244
        %v1246 = vrcp.pop %v1204
        %v1247 = vmul.f32 1.0, %v1246
        %v1248 = vrcp.pop %v1205
        %v1249 = vmul.f32 1.0, %v1248
        %v1250 = vrcp.pop %v1206
        %v1251 = vmul.f32 1.0, %v1250
        %v1252 = vrcp.pop %v1207
        %v1253 = vmul.f32 1.0, %v1252
        %v1254 = vrcp.pop %v1208
        %v1255 = vmul.f32 1.0, %v1254
        %v1256 = vrcp.pop %v1209
        %v1257 = vmul.f32 1.0, %v1256
        %v1258 = vrcp.pop %v1210
        %v1259 = vmul.f32 1.0, %v1258
        %v1260 = vrcp.pop %v1211
        %v1261 = vmul.f32 1.0, %v1260
        %v1262 = vrcp.pop %v1212
        %v1263 = vmul.f32 1.0, %v1262
        %v1264 = vrcp.pop %v1213
        %v1265 = vmul.f32 1.0, %v1264
        %v1266 = vrcp.pop %v1214
        %v1267 = vmul.f32 1.0, %v1266
        %v1268 = vrcp.pop %v1215
        %v1269 = vmul.f32 1.0, %v1268
        %v1270 = vrcp.pop %v1216
        %v1271 = vmul.f32 1.0, %v1270
        %v1272 = vrcp.pop %v1217
        %v1273 = vmul.f32 1.0, %v1272
        %v1274 = vrcp.pop %v1218
        %v1275 = vmul.f32 1.0, %v1274
        %v1276 = vrcp.pop %v1219
        %v1277 = vmul.f32 1.0, %v1276
        %v1278 = vrcp.pop %v1220
        %v1279 = vmul.f32 1.0, %v1278
        %v1280 = vrcp.pop %v1221
        %v1281 = vmul.f32 1.0, %v1280
        %v1282 = vrcp.pop %v1222
        %v1283 = vmul.f32 1.0, %v1282
        %v1284 = vrcp.pop %v1223
        %v1285 = vmul.f32 1.0, %v1284
        %v1286 = vrcp.pop %v1224
        %v1287 = vmul.f32 1.0, %v1286
        %v1288 = vrcp.pop %v1225
        %v1289 = vmul.f32 1.0, %v1288
        %v1290 = vmul.f32 %v715, %v1227
        %v1291 = vmul.f32 %v717, %v1229
        %v1292 = vmul.f32 %v719, %v1231
        %v1293 = vmul.f32 %v721, %v1233
        %v1294 = vmul.f32 %v725, %v1235
        %v1295 = vmul.f32 %v727, %v1237
        %v1296 = vmul.f32 %v729, %v1239
        %v1297 = vmul.f32 %v731, %v1241
        %v1298 = vmul.f32 %v735, %v1243
        %v1299 = vmul.f32 %v737, %v1245
        %v1300 = vmul.f32 %v739, %v1247
        %v1301 = vmul.f32 %v741, %v1249
        %v1302 = vmul.f32 %v745, %v1251
        %v1303 = vmul.f32 %v747, %v1253
        %v1304 = vmul.f32 %v749, %v1255
        %v1305 = vmul.f32 %v751, %v1257
        %v1306 = vmul.f32 %v755, %v1259
        %v1307 = vmul.f32 %v757, %v1261
        %v1308 = vmul.f32 %v759, %v1263
        %v1309 = vmul.f32 %v761, %v1265
        %v1310 = vmul.f32 %v765, %v1267
        %v1311 = vmul.f32 %v767, %v1269
        %v1312 = vmul.f32 %v769, %v1271
        %v1313 = vmul.f32 %v771, %v1273
        %v1314 = vmul.f32 %v775, %v1275
        %v1315 = vmul.f32 %v777, %v1277
        %v1316 = vmul.f32 %v779, %v1279
        %v1317 = vmul.f32 %v781, %v1281
        %v1318 = vmul.f32 %v785, %v1283
        %v1319 = vmul.f32 %v787, %v1285
        %v1320 = vmul.f32 %v789, %v1287
        %v1321 = vmul.f32 %v791, %v1289
        %v1322 = vmul.f32 %v1290, %v1020
        %v1323 = vmul.f32 %v1291, %v1022
        %v1324 = vmul.f32 %v1292, %v1024
        %v1325 = vmul.f32 %v1293, %v1026
        %v1326 = vmul.f32 %v1294, %v1030
        %v1327 = vmul.f32 %v1295, %v1032
        %v1328 = vmul.f32 %v1296, %v1034
        %v1329 = vmul.f32 %v1297, %v1036
        %v1330 = vmul.f32 %v1298, %v1040
        %v1331 = vmul.f32 %v1299, %v1042
        %v1332 = vmul.f32 %v1300, %v1044
        %v1333 = vmul.f32 %v1301, %v1046
        %v1334 = vmul.f32 %v1302, %v1050
        %v1335 = vmul.f32 %v1303, %v1052
        %v1336 = vmul.f32 %v1304, %v1054
        %v1337 = vmul.f32 %v1305, %v1056
        %v1338 = vmul.f32 %v1306, %v1060
        %v1339 = vmul.f32 %v1307, %v1062
        %v1340 = vmul.f32 %v1308, %v1064
        %v1341 = vmul.f32 %v1309, %v1066
        %v1342 = vmul.f32 %v1310, %v1070
        %v1343 = vmul.f32 %v1311, %v1072
        %v1344 = vmul.f32 %v1312, %v1074
        %v1345 = vmul.f32 %v1313, %v1076
        %v1346 = vmul.f32 %v1314, %v1080
        %v1347 = vmul.f32 %v1315, %v1082
        %v1348 = vmul.f32 %v1316, %v1084
        %v1349 = vmul.f32 %v1317, %v1086
        %v1350 = vmul.f32 %v1318, %v1090
        %v1351 = vmul.f32 %v1319, %v1092
        %v1352 = vmul.f32 %v1320, %v1094
        %v1353 = vmul.f32 %v1321, %v1096
        %v1354 = vld [vmem:[#allocation2] sm:$0xff]
        %v1355 = vld [vmem:[#allocation2 + $0x8] sm:$0xff]
        %v1356 = vld [vmem:[#allocation2 + $0x10] sm:$0xff]
        %v1357 = vld [vmem:[#allocation2 + $0x18] sm:$0xff]
        %v1358 = vld [vmem:[#allocation2 + $0x20] sm:$0xff]
        %v1359 = vld [vmem:[#allocation2 + $0x28] sm:$0xff]
        %v1360 = vld [vmem:[#allocation2 + $0x30] sm:$0xff]
        %v1361 = vld [vmem:[#allocation2 + $0x38] sm:$0xff]
        %v1362 = vld [vmem:[#allocation2 + $0x40] sm:$0xff]
        %v1363 = vld [vmem:[#allocation2 + $0x48] sm:$0xff]
        %v1364 = vld [vmem:[#allocation2 + $0x50] sm:$0xff]
        %v1365 = vld [vmem:[#allocation2 + $0x58] sm:$0xff]
        %v1366 = vld [vmem:[#allocation2 + $0x60] sm:$0xff]
        %v1367 = vld [vmem:[#allocation2 + $0x68] sm:$0xff]
        %v1368 = vld [vmem:[#allocation2 + $0x70] sm:$0xff]
        %v1369 = vld [vmem:[#allocation2 + $0x78] sm:$0xff]
        %v1370 = vld [vmem:[#allocation2 + $0x80] sm:$0xff]
        %v1371 = vld [vmem:[#allocation2 + $0x88] sm:$0xff]
        %v1372 = vld [vmem:[#allocation2 + $0x90] sm:$0xff]
        %v1373 = vld [vmem:[#allocation2 + $0x98] sm:$0xff]
        %v1374 = vld [vmem:[#allocation2 + $0xa0] sm:$0xff]
        %v1375 = vld [vmem:[#allocation2 + $0xa8] sm:$0xff]
        %v1376 = vld [vmem:[#allocation2 + $0xb0] sm:$0xff]
        %v1377 = vld [vmem:[#allocation2 + $0xb8] sm:$0xff]
        %v1378 = vld [vmem:[#allocation2 + $0xc0] sm:$0xff]
        %v1379 = vld [vmem:[#allocation2 + $0xc8] sm:$0xff]
        %v1380 = vld [vmem:[#allocation2 + $0xd0] sm:$0xff]
        %v1381 = vld [vmem:[#allocation2 + $0xd8] sm:$0xff]
        %v1382 = vld [vmem:[#allocation2 + $0xe0] sm:$0xff]
        %v1383 = vld [vmem:[#allocation2 + $0xe8] sm:$0xff]
        %v1384 = vld [vmem:[#allocation2 + $0xf0] sm:$0xff]
        %v1385 = vld [vmem:[#allocation2 + $0xf8] sm:$0xff]
        %v1386 = vpack.c.bf16 %v1324, %v1322
        %v1387 = vpack.c.bf16 %v1325, %v1323
        %v1388 = vpack.c.bf16 %v1328, %v1326
        %v1389 = vpack.c.bf16 %v1329, %v1327
        %v1390 = vpack.c.bf16 %v1332, %v1330
        %v1391 = vpack.c.bf16 %v1333, %v1331
        %v1392 = vpack.c.bf16 %v1336, %v1334
        %v1393 = vpack.c.bf16 %v1337, %v1335
        %v1394 = vpack.c.bf16 %v1340, %v1338
        %v1395 = vpack.c.bf16 %v1341, %v1339
        %v1396 = vpack.c.bf16 %v1344, %v1342
        %v1397 = vpack.c.bf16 %v1345, %v1343
        %v1398 = vpack.c.bf16 %v1348, %v1346
        %v1399 = vpack.c.bf16 %v1349, %v1347
        %v1400 = vpack.c.bf16 %v1352, %v1350
        %v1401 = vpack.c.bf16 %v1353, %v1351
        %v1402 = vld [vmem:[%s310] sm:$0xff]
        %v1403 = vld [vmem:[%s310 + $0x8] sm:$0xff]
        %v1404 = vld [vmem:[%s310 + $0x10] sm:$0xff]
        %v1405 = vld [vmem:[%s310 + $0x18] sm:$0xff]
        %v1406 = vld [vmem:[%s310 + $0x20] sm:$0xff]
        %v1407 = vld [vmem:[%s310 + $0x28] sm:$0xff]
        %v1408 = vld [vmem:[%s310 + $0x30] sm:$0xff]
        %v1409 = vld [vmem:[%s310 + $0x38] sm:$0xff]
        %v1410 = vld [vmem:[%s310 + $0x40] sm:$0xff]
        %v1411 = vld [vmem:[%s310 + $0x48] sm:$0xff]
        %v1412 = vld [vmem:[%s310 + $0x50] sm:$0xff]
        %v1413 = vld [vmem:[%s310 + $0x58] sm:$0xff]
        %v1414 = vld [vmem:[%s310 + $0x60] sm:$0xff]
        %v1415 = vld [vmem:[%s310 + $0x68] sm:$0xff]
        %v1416 = vld [vmem:[%s310 + $0x70] sm:$0xff]
        %v1417 = vld [vmem:[%s310 + $0x78] sm:$0xff]
        %v1418 = vld [vmem:[%s310 + $0x80] sm:$0xff]
        %v1419 = vld [vmem:[%s310 + $0x88] sm:$0xff]
        %v1420 = vld [vmem:[%s310 + $0x90] sm:$0xff]
        %v1421 = vld [vmem:[%s310 + $0x98] sm:$0xff]
        %v1422 = vld [vmem:[%s310 + $0xa0] sm:$0xff]
        %v1423 = vld [vmem:[%s310 + $0xa8] sm:$0xff]
        %v1424 = vld [vmem:[%s310 + $0xb0] sm:$0xff]
        %v1425 = vld [vmem:[%s310 + $0xb8] sm:$0xff]
        %v1426 = vld [vmem:[%s310 + $0xc0] sm:$0xff]
        %v1427 = vld [vmem:[%s310 + $0xc8] sm:$0xff]
        %v1428 = vld [vmem:[%s310 + $0xd0] sm:$0xff]
        %v1429 = vld [vmem:[%s310 + $0xd8] sm:$0xff]
        %v1430 = vld [vmem:[%s310 + $0xe0] sm:$0xff]
        %v1431 = vld [vmem:[%s310 + $0xe8] sm:$0xff]
        %v1432 = vld [vmem:[%s310 + $0xf0] sm:$0xff]
        %v1433 = vld [vmem:[%s310 + $0xf8] sm:$0xff]
        %v1466 = vunpack.c.l.b16 %v1402
        %v1467 = vunpack.c.h.b16 %v1402
        %v1468 = vunpack.c.l.b16 %v1403
        %v1469 = vunpack.c.h.b16 %v1403
        %v1470 = vunpack.c.l.b16 %v1404
        %v1471 = vunpack.c.h.b16 %v1404
        %v1472 = vunpack.c.l.b16 %v1405
        %v1473 = vunpack.c.h.b16 %v1405
        %v1474 = vunpack.c.l.b16 %v1406
        %v1475 = vunpack.c.h.b16 %v1406
        %v1476 = vunpack.c.l.b16 %v1407
        %v1477 = vunpack.c.h.b16 %v1407
        %v1478 = vunpack.c.l.b16 %v1408
        %v1479 = vunpack.c.h.b16 %v1408
        %v1480 = vunpack.c.l.b16 %v1409
        %v1481 = vunpack.c.h.b16 %v1409
        %v1482 = vunpack.c.l.b16 %v1410
        %v1483 = vunpack.c.h.b16 %v1410
        %v1484 = vunpack.c.l.b16 %v1411
        %v1485 = vunpack.c.h.b16 %v1411
        %v1486 = vunpack.c.l.b16 %v1412
        %v1487 = vunpack.c.h.b16 %v1412
        %v1488 = vunpack.c.l.b16 %v1413
        %v1489 = vunpack.c.h.b16 %v1413
        %v1490 = vunpack.c.l.b16 %v1414
        %v1491 = vunpack.c.h.b16 %v1414
        %v1492 = vunpack.c.l.b16 %v1415
        %v1493 = vunpack.c.h.b16 %v1415
        %v1494 = vunpack.c.l.b16 %v1416
        %v1495 = vunpack.c.h.b16 %v1416
        %v1496 = vunpack.c.l.b16 %v1417
        %v1497 = vunpack.c.h.b16 %v1417
        %v1498 = vunpack.c.l.b16 %v1418
        %v1499 = vunpack.c.h.b16 %v1418
        %v1500 = vunpack.c.l.b16 %v1419
        %v1501 = vunpack.c.h.b16 %v1419
        %v1502 = vunpack.c.l.b16 %v1420
        %v1503 = vunpack.c.h.b16 %v1420
        %v1504 = vunpack.c.l.b16 %v1421
        %v1505 = vunpack.c.h.b16 %v1421
        %v1506 = vunpack.c.l.b16 %v1422
        %v1507 = vunpack.c.h.b16 %v1422
        %v1508 = vunpack.c.l.b16 %v1423
        %v1509 = vunpack.c.h.b16 %v1423
        %v1510 = vunpack.c.l.b16 %v1424
        %v1511 = vunpack.c.h.b16 %v1424
        %v1512 = vunpack.c.l.b16 %v1425
        %v1513 = vunpack.c.h.b16 %v1425
        %v1514 = vunpack.c.l.b16 %v1426
        %v1515 = vunpack.c.h.b16 %v1426
        %v1516 = vunpack.c.l.b16 %v1427
        %v1517 = vunpack.c.h.b16 %v1427
        %v1518 = vunpack.c.l.b16 %v1428
        %v1519 = vunpack.c.h.b16 %v1428
        %v1520 = vunpack.c.l.b16 %v1429
        %v1521 = vunpack.c.h.b16 %v1429
        %v1522 = vunpack.c.l.b16 %v1430
        %v1523 = vunpack.c.h.b16 %v1430
        %v1524 = vunpack.c.l.b16 %v1431
        %v1525 = vunpack.c.h.b16 %v1431
        %v1526 = vunpack.c.l.b16 %v1432
        %v1527 = vunpack.c.h.b16 %v1432
        %v1528 = vunpack.c.l.b16 %v1433
        %v1529 = vunpack.c.h.b16 %v1433
        %v1530 = vpack.c.b16 %v1468, %v1466
        %v1531 = vpack.c.b16 %v1469, %v1467
        %v1532 = vpack.c.b16 %v1472, %v1470
        %v1533 = vpack.c.b16 %v1473, %v1471
        %v1534 = vpack.c.b16 %v1476, %v1474
        %v1535 = vpack.c.b16 %v1477, %v1475
        %v1536 = vpack.c.b16 %v1480, %v1478
        %v1537 = vpack.c.b16 %v1481, %v1479
        %v1538 = vpack.c.b16 %v1484, %v1482
        %v1539 = vpack.c.b16 %v1485, %v1483
        %v1540 = vpack.c.b16 %v1488, %v1486
        %v1541 = vpack.c.b16 %v1489, %v1487
        %v1542 = vpack.c.b16 %v1492, %v1490
        %v1543 = vpack.c.b16 %v1493, %v1491
        %v1544 = vpack.c.b16 %v1496, %v1494
        %v1545 = vpack.c.b16 %v1497, %v1495
        %v1546 = vpack.c.b16 %v1500, %v1498
        %v1547 = vpack.c.b16 %v1501, %v1499
        %v1548 = vpack.c.b16 %v1504, %v1502
        %v1549 = vpack.c.b16 %v1505, %v1503
        %v1550 = vpack.c.b16 %v1508, %v1506
        %v1551 = vpack.c.b16 %v1509, %v1507
        %v1552 = vpack.c.b16 %v1512, %v1510
        %v1553 = vpack.c.b16 %v1513, %v1511
        %v1554 = vpack.c.b16 %v1516, %v1514
        %v1555 = vpack.c.b16 %v1517, %v1515
        %v1556 = vpack.c.b16 %v1520, %v1518
        %v1557 = vpack.c.b16 %v1521, %v1519
        %v1558 = vpack.c.b16 %v1524, %v1522
        %v1559 = vpack.c.b16 %v1525, %v1523
        %v1560 = vpack.c.b16 %v1528, %v1526
        %v1561 = vpack.c.b16 %v1529, %v1527
        %1594 = vmatprep.subr.bf16.mxu0 %v1531
        %1595 = vmatpush1.bf16.msra.mxu0 %v1530
        %1596 = vmatprep.subr.bf16.mxu0 %v1533
        %1597 = vmatpush1.bf16.msra.mxu0 %v1532
        %1598 = vmatprep.subr.bf16.mxu0 %v1535
        %1599 = vmatpush1.bf16.msra.mxu0 %v1534
        %1600 = vmatprep.subr.bf16.mxu0 %v1537
        %1601 = vmatpush1.bf16.msra.mxu0 %v1536
        %1602 = vmatprep.subr.bf16.mxu0 %v1539
        %1603 = vmatpush1.bf16.msra.mxu0 %v1538
        %1604 = vmatprep.subr.bf16.mxu0 %v1541
        %1605 = vmatpush1.bf16.msra.mxu0 %v1540
        %1606 = vmatprep.subr.bf16.mxu0 %v1543
        %1607 = vmatpush1.bf16.msra.mxu0 %v1542
        %1608 = vmatprep.subr.bf16.mxu0 %v1545
        %1609 = vmatpush1.bf16.msra.mxu0 %v1544
        %1610 = vmatprep.subr.bf16.mxu0 %v1547
        %1611 = vmatpush1.bf16.msra.mxu0 %v1546
        %1612 = vmatprep.subr.bf16.mxu0 %v1549
        %1613 = vmatpush1.bf16.msra.mxu0 %v1548
        %1614 = vmatprep.subr.bf16.mxu0 %v1551
        %1615 = vmatpush1.bf16.msra.mxu0 %v1550
        %1616 = vmatprep.subr.bf16.mxu0 %v1553
        %1617 = vmatpush1.bf16.msra.mxu0 %v1552
        %1618 = vmatprep.subr.bf16.mxu0 %v1555
        %1619 = vmatpush1.bf16.msra.mxu0 %v1554
        %1620 = vmatprep.subr.bf16.mxu0 %v1557
        %1621 = vmatpush1.bf16.msra.mxu0 %v1556
        %1622 = vmatprep.subr.bf16.mxu0 %v1559
        %1623 = vmatpush1.bf16.msra.mxu0 %v1558
        %1624 = vmatprep.subr.bf16.mxu0 %v1561
        %1625 = vmatpush1.bf16.msra.mxu0 %v1560
        %1626 = vmatprep.mubr.bf16.mxu0 %v1387
        %1627 = vmatmul.mubr.bf16.gmra.mrb[0].mxu0 %v1386
        %v1628 = vpop.f32.mrb[0].mxu0
        %v1629 = vadd.f32 0.0, %v1628
        %v1630 = vpop.f32.mrb[0].mxu0
        %v1631 = vadd.f32 0.0, %v1630
        %v1632 = vpop.f32.mrb[0].mxu0
        %v1633 = vadd.f32 0.0, %v1632
        %v1634 = vpop.f32.mrb[0].mxu0
        %v1635 = vadd.f32 0.0, %v1634
        %1636 = vmatprep.mubr.bf16.mxu0 %v1389
        %1637 = vmatmul.mubr.bf16.gmra.mrb[0].mxu0 %v1388
        %v1638 = vpop.f32.mrb[0].mxu0
        %v1639 = vadd.f32 0.0, %v1638
        %v1640 = vpop.f32.mrb[0].mxu0
        %v1641 = vadd.f32 0.0, %v1640
        %v1642 = vpop.f32.mrb[0].mxu0
        %v1643 = vadd.f32 0.0, %v1642
        %v1644 = vpop.f32.mrb[0].mxu0
        %v1645 = vadd.f32 0.0, %v1644
        %1646 = vmatprep.mubr.bf16.mxu0 %v1391
        %1647 = vmatmul.mubr.bf16.gmra.mrb[0].mxu0 %v1390
        %v1648 = vpop.f32.mrb[0].mxu0
        %v1649 = vadd.f32 0.0, %v1648
        %v1650 = vpop.f32.mrb[0].mxu0
        %v1651 = vadd.f32 0.0, %v1650
        %v1652 = vpop.f32.mrb[0].mxu0
        %v1653 = vadd.f32 0.0, %v1652
        %v1654 = vpop.f32.mrb[0].mxu0
        %v1655 = vadd.f32 0.0, %v1654
        %1656 = vmatprep.mubr.bf16.mxu0 %v1393
        %1657 = vmatmul.mubr.bf16.gmra.mrb[0].mxu0 %v1392
        %v1658 = vpop.f32.mrb[0].mxu0
        %v1659 = vadd.f32 0.0, %v1658
        %v1660 = vpop.f32.mrb[0].mxu0
        %v1661 = vadd.f32 0.0, %v1660
        %v1662 = vpop.f32.mrb[0].mxu0
        %v1663 = vadd.f32 0.0, %v1662
        %v1664 = vpop.f32.mrb[0].mxu0
        %v1665 = vadd.f32 0.0, %v1664
        %1666 = vmatprep.mubr.bf16.mxu0 %v1395
        %1667 = vmatmul.mubr.bf16.gmra.mrb[0].mxu0 %v1394
        %v1668 = vpop.f32.mrb[0].mxu0
        %v1669 = vadd.f32 0.0, %v1668
        %v1670 = vpop.f32.mrb[0].mxu0
        %v1671 = vadd.f32 0.0, %v1670
        %v1672 = vpop.f32.mrb[0].mxu0
        %v1673 = vadd.f32 0.0, %v1672
        %v1674 = vpop.f32.mrb[0].mxu0
        %v1675 = vadd.f32 0.0, %v1674
        %1676 = vmatprep.mubr.bf16.mxu0 %v1397
        %1677 = vmatmul.mubr.bf16.gmra.mrb[0].mxu0 %v1396
        %v1678 = vpop.f32.mrb[0].mxu0
        %v1679 = vadd.f32 0.0, %v1678
        %v1680 = vpop.f32.mrb[0].mxu0
        %v1681 = vadd.f32 0.0, %v1680
        %v1682 = vpop.f32.mrb[0].mxu0
        %v1683 = vadd.f32 0.0, %v1682
        %v1684 = vpop.f32.mrb[0].mxu0
        %v1685 = vadd.f32 0.0, %v1684
        %1686 = vmatprep.mubr.bf16.mxu0 %v1399
        %1687 = vmatmul.mubr.bf16.gmra.mrb[0].mxu0 %v1398
        %v1688 = vpop.f32.mrb[0].mxu0
        %v1689 = vadd.f32 0.0, %v1688
        %v1690 = vpop.f32.mrb[0].mxu0
        %v1691 = vadd.f32 0.0, %v1690
        %v1692 = vpop.f32.mrb[0].mxu0
        %v1693 = vadd.f32 0.0, %v1692
        %v1694 = vpop.f32.mrb[0].mxu0
        %v1695 = vadd.f32 0.0, %v1694
        %1696 = vmatprep.mubr.bf16.mxu0 %v1401
        %1697 = vmatmul.mubr.bf16.gmra.mrb[0].mxu0 %v1400
        %v1698 = vpop.f32.mrb[0].mxu0
        %v1699 = vadd.f32 0.0, %v1698
        %v1700 = vpop.f32.mrb[0].mxu0
        %v1701 = vadd.f32 0.0, %v1700
        %v1702 = vpop.f32.mrb[0].mxu0
        %v1703 = vadd.f32 0.0, %v1702
        %v1704 = vpop.f32.mrb[0].mxu0
        %v1705 = vadd.f32 0.0, %v1704
        %1706 = vdwg.mxu0
        %v1707 = vadd.f32 %v1354, %v1629
        %v1708 = vadd.f32 %v1355, %v1631
        %v1709 = vadd.f32 %v1356, %v1633
        %v1710 = vadd.f32 %v1357, %v1635
        %v1711 = vadd.f32 %v1358, %v1639
        %v1712 = vadd.f32 %v1359, %v1641
        %v1713 = vadd.f32 %v1360, %v1643
        %v1714 = vadd.f32 %v1361, %v1645
        %v1715 = vadd.f32 %v1362, %v1649
        %v1716 = vadd.f32 %v1363, %v1651
        %v1717 = vadd.f32 %v1364, %v1653
        %v1718 = vadd.f32 %v1365, %v1655
        %v1719 = vadd.f32 %v1366, %v1659
        %v1720 = vadd.f32 %v1367, %v1661
        %v1721 = vadd.f32 %v1368, %v1663
        %v1722 = vadd.f32 %v1369, %v1665
        %v1723 = vadd.f32 %v1370, %v1669
        %v1724 = vadd.f32 %v1371, %v1671
        %v1725 = vadd.f32 %v1372, %v1673
        %v1726 = vadd.f32 %v1373, %v1675
        %v1727 = vadd.f32 %v1374, %v1679
        %v1728 = vadd.f32 %v1375, %v1681
        %v1729 = vadd.f32 %v1376, %v1683
        %v1730 = vadd.f32 %v1377, %v1685
        %v1731 = vadd.f32 %v1378, %v1689
        %v1732 = vadd.f32 %v1379, %v1691
        %v1733 = vadd.f32 %v1380, %v1693
        %v1734 = vadd.f32 %v1381, %v1695
        %v1735 = vadd.f32 %v1382, %v1699
        %v1736 = vadd.f32 %v1383, %v1701
        %v1737 = vadd.f32 %v1384, %v1703
        %v1738 = vadd.f32 %v1385, %v1705
        %1739 = vst [vmem:[#allocation2] sm:$0xff] %v1707
        %1740 = vst [vmem:[#allocation2 + $0x8] sm:$0xff] %v1708
        %1741 = vst [vmem:[#allocation2 + $0x10] sm:$0xff] %v1709
        %1742 = vst [vmem:[#allocation2 + $0x18] sm:$0xff] %v1710
        %1743 = vst [vmem:[#allocation2 + $0x20] sm:$0xff] %v1711
        %1744 = vst [vmem:[#allocation2 + $0x28] sm:$0xff] %v1712
        %1745 = vst [vmem:[#allocation2 + $0x30] sm:$0xff] %v1713
        %1746 = vst [vmem:[#allocation2 + $0x38] sm:$0xff] %v1714
        %1747 = vst [vmem:[#allocation2 + $0x40] sm:$0xff] %v1715
        %1748 = vst [vmem:[#allocation2 + $0x48] sm:$0xff] %v1716
        %1749 = vst [vmem:[#allocation2 + $0x50] sm:$0xff] %v1717
        %1750 = vst [vmem:[#allocation2 + $0x58] sm:$0xff] %v1718
        %1751 = vst [vmem:[#allocation2 + $0x60] sm:$0xff] %v1719
        %1752 = vst [vmem:[#allocation2 + $0x68] sm:$0xff] %v1720
        %1753 = vst [vmem:[#allocation2 + $0x70] sm:$0xff] %v1721
        %1754 = vst [vmem:[#allocation2 + $0x78] sm:$0xff] %v1722
        %1755 = vst [vmem:[#allocation2 + $0x80] sm:$0xff] %v1723
        %1756 = vst [vmem:[#allocation2 + $0x88] sm:$0xff] %v1724
        %1757 = vst [vmem:[#allocation2 + $0x90] sm:$0xff] %v1725
        %1758 = vst [vmem:[#allocation2 + $0x98] sm:$0xff] %v1726
        %1759 = vst [vmem:[#allocation2 + $0xa0] sm:$0xff] %v1727
        %1760 = vst [vmem:[#allocation2 + $0xa8] sm:$0xff] %v1728
        %1761 = vst [vmem:[#allocation2 + $0xb0] sm:$0xff] %v1729
        %1762 = vst [vmem:[#allocation2 + $0xb8] sm:$0xff] %v1730
        %1763 = vst [vmem:[#allocation2 + $0xc0] sm:$0xff] %v1731
        %1764 = vst [vmem:[#allocation2 + $0xc8] sm:$0xff] %v1732
        %1765 = vst [vmem:[#allocation2 + $0xd0] sm:$0xff] %v1733
        %1766 = vst [vmem:[#allocation2 + $0xd8] sm:$0xff] %v1734
        %1767 = vst [vmem:[#allocation2 + $0xe0] sm:$0xff] %v1735
        %1768 = vst [vmem:[#allocation2 + $0xe8] sm:$0xff] %v1736
        %1769 = vst [vmem:[#allocation2 + $0xf0] sm:$0xff] %v1737
        %1770 = vst [vmem:[#allocation2 + $0xf8] sm:$0xff] %v1738
        %p1771 = scmp.eq.s32.totalorder %s32, 1
        // Predicated region
        $region57: #{tpu_custom_call.1} parent=35 // pred_check
          %p1772 = pneg %p1771
        $region58: #{tpu_custom_call.1} parent=35 // pred_check_branch
          %1774 = sbr.rel (%p1772) target = $region60
        $region59: #{tpu_custom_call.1} parent=35 // pred_region
          %v1775 = vld [vmem:[#allocation2] sm:$0xff]
          %v1776 = vld [vmem:[#allocation2 + $0x8] sm:$0xff]
          %v1777 = vld [vmem:[#allocation2 + $0x10] sm:$0xff]
          %v1778 = vld [vmem:[#allocation2 + $0x18] sm:$0xff]
          %v1779 = vld [vmem:[#allocation2 + $0x20] sm:$0xff]
          %v1780 = vld [vmem:[#allocation2 + $0x28] sm:$0xff]
          %v1781 = vld [vmem:[#allocation2 + $0x30] sm:$0xff]
          %v1782 = vld [vmem:[#allocation2 + $0x38] sm:$0xff]
          %v1783 = vld [vmem:[#allocation2 + $0x40] sm:$0xff]
          %v1784 = vld [vmem:[#allocation2 + $0x48] sm:$0xff]
          %v1785 = vld [vmem:[#allocation2 + $0x50] sm:$0xff]
          %v1786 = vld [vmem:[#allocation2 + $0x58] sm:$0xff]
          %v1787 = vld [vmem:[#allocation2 + $0x60] sm:$0xff]
          %v1788 = vld [vmem:[#allocation2 + $0x68] sm:$0xff]
          %v1789 = vld [vmem:[#allocation2 + $0x70] sm:$0xff]
          %v1790 = vld [vmem:[#allocation2 + $0x78] sm:$0xff]
          %v1791 = vld [vmem:[#allocation2 + $0x80] sm:$0xff]
          %v1792 = vld [vmem:[#allocation2 + $0x88] sm:$0xff]
          %v1793 = vld [vmem:[#allocation2 + $0x90] sm:$0xff]
          %v1794 = vld [vmem:[#allocation2 + $0x98] sm:$0xff]
          %v1795 = vld [vmem:[#allocation2 + $0xa0] sm:$0xff]
          %v1796 = vld [vmem:[#allocation2 + $0xa8] sm:$0xff]
          %v1797 = vld [vmem:[#allocation2 + $0xb0] sm:$0xff]
          %v1798 = vld [vmem:[#allocation2 + $0xb8] sm:$0xff]
          %v1799 = vld [vmem:[#allocation2 + $0xc0] sm:$0xff]
          %v1800 = vld [vmem:[#allocation2 + $0xc8] sm:$0xff]
          %v1801 = vld [vmem:[#allocation2 + $0xd0] sm:$0xff]
          %v1802 = vld [vmem:[#allocation2 + $0xd8] sm:$0xff]
          %v1803 = vld [vmem:[#allocation2 + $0xe0] sm:$0xff]
          %v1804 = vld [vmem:[#allocation2 + $0xe8] sm:$0xff]
          %v1805 = vld [vmem:[#allocation2 + $0xf0] sm:$0xff]
          %v1806 = vld [vmem:[#allocation2 + $0xf8] sm:$0xff]
          %v1807 = vpack.c.bf16 %v1777, %v1775
          %v1808 = vpack.c.bf16 %v1778, %v1776
          %v1809 = vpack.c.bf16 %v1781, %v1779
          %v1810 = vpack.c.bf16 %v1782, %v1780
          %v1811 = vpack.c.bf16 %v1785, %v1783
          %v1812 = vpack.c.bf16 %v1786, %v1784
          %v1813 = vpack.c.bf16 %v1789, %v1787
          %v1814 = vpack.c.bf16 %v1790, %v1788
          %v1815 = vpack.c.bf16 %v1793, %v1791
          %v1816 = vpack.c.bf16 %v1794, %v1792
          %v1817 = vpack.c.bf16 %v1797, %v1795
          %v1818 = vpack.c.bf16 %v1798, %v1796
          %v1819 = vpack.c.bf16 %v1801, %v1799
          %v1820 = vpack.c.bf16 %v1802, %v1800
          %v1821 = vpack.c.bf16 %v1805, %v1803
          %v1822 = vpack.c.bf16 %v1806, %v1804
          %v1839 = vunpack.c.l.b16 %v1807
          %v1840 = vunpack.c.l.b16 %v1808
          %v1841 = vunpack.c.h.b16 %v1807
          %v1842 = vunpack.c.h.b16 %v1808
          %v1843 = vunpack.c.l.b16 %v1809
          %v1844 = vunpack.c.l.b16 %v1810
          %v1845 = vunpack.c.h.b16 %v1809
          %v1846 = vunpack.c.h.b16 %v1810
          %v1847 = vunpack.c.l.b16 %v1811
          %v1848 = vunpack.c.l.b16 %v1812
          %v1849 = vunpack.c.h.b16 %v1811
          %v1850 = vunpack.c.h.b16 %v1812
          %v1851 = vunpack.c.l.b16 %v1813
          %v1852 = vunpack.c.l.b16 %v1814
          %v1853 = vunpack.c.h.b16 %v1813
          %v1854 = vunpack.c.h.b16 %v1814
          %v1855 = vunpack.c.l.b16 %v1815
          %v1856 = vunpack.c.l.b16 %v1816
          %v1857 = vunpack.c.h.b16 %v1815
          %v1858 = vunpack.c.h.b16 %v1816
          %v1859 = vunpack.c.l.b16 %v1817
          %v1860 = vunpack.c.l.b16 %v1818
          %v1861 = vunpack.c.h.b16 %v1817
          %v1862 = vunpack.c.h.b16 %v1818
          %v1863 = vunpack.c.l.b16 %v1819
          %v1864 = vunpack.c.l.b16 %v1820
          %v1865 = vunpack.c.h.b16 %v1819
          %v1866 = vunpack.c.h.b16 %v1820
          %v1867 = vunpack.c.l.b16 %v1821
          %v1868 = vunpack.c.l.b16 %v1822
          %v1869 = vunpack.c.h.b16 %v1821
          %v1870 = vunpack.c.h.b16 %v1822
          %v1871 = vpack.c.b16 %v1840, %v1839
          %v1872 = vpack.c.b16 %v1842, %v1841
          %v1873 = vpack.c.b16 %v1844, %v1843
          %v1874 = vpack.c.b16 %v1846, %v1845
          %v1875 = vpack.c.b16 %v1848, %v1847
          %v1876 = vpack.c.b16 %v1850, %v1849
          %v1877 = vpack.c.b16 %v1852, %v1851
          %v1878 = vpack.c.b16 %v1854, %v1853
          %v1879 = vpack.c.b16 %v1856, %v1855
          %v1880 = vpack.c.b16 %v1858, %v1857
          %v1881 = vpack.c.b16 %v1860, %v1859
          %v1882 = vpack.c.b16 %v1862, %v1861
          %v1883 = vpack.c.b16 %v1864, %v1863
          %v1884 = vpack.c.b16 %v1866, %v1865
          %v1885 = vpack.c.b16 %v1868, %v1867
          %v1886 = vpack.c.b16 %v1870, %v1869
          %1903 = vst [vmem:[%s349] sm:$0xff] %v1871
          %1904 = vst [vmem:[%s349 + $0x8] sm:$0xff] %v1872
          %1905 = vst [vmem:[%s349 + $0x10] sm:$0xff] %v1873
          %1906 = vst [vmem:[%s349 + $0x18] sm:$0xff] %v1874
          %1907 = vst [vmem:[%s349 + $0x20] sm:$0xff] %v1875
          %1908 = vst [vmem:[%s349 + $0x28] sm:$0xff] %v1876
          %1909 = vst [vmem:[%s349 + $0x30] sm:$0xff] %v1877
          %1910 = vst [vmem:[%s349 + $0x38] sm:$0xff] %v1878
          %1911 = vst [vmem:[%s349 + $0x40] sm:$0xff] %v1879
          %1912 = vst [vmem:[%s349 + $0x48] sm:$0xff] %v1880
          %1913 = vst [vmem:[%s349 + $0x50] sm:$0xff] %v1881
          %1914 = vst [vmem:[%s349 + $0x58] sm:$0xff] %v1882
          %1915 = vst [vmem:[%s349 + $0x60] sm:$0xff] %v1883
          %1916 = vst [vmem:[%s349 + $0x68] sm:$0xff] %v1884
          %1917 = vst [vmem:[%s349 + $0x70] sm:$0xff] %v1885
          %1918 = vst [vmem:[%s349 + $0x78] sm:$0xff] %v1886
        $region60: #{tpu_custom_call.1} parent=35 // pred_fallthru
          _
        %s1919 = sand.u32 %s153, 1
        %s1920 = scalar_lea.sflag [#allocation5], %s1919
        %s1921 = sand.u32 %s153, 1
        %s1922 = smul.addr %s1921, 128
        %s1923 = scalar_lea.vmem [#allocation11], %s1922
        // Predicated region
        $region61: #{tpu_custom_call.1} parent=35 // pred_check
          %p1924 = pneg %p163
        $region62: #{tpu_custom_call.1} parent=35 // pred_check_branch
          %1926 = sbr.rel (%p1924) target = $region64
        $region63: #{tpu_custom_call.1} parent=35 // pred_region
          %s1927 = smul.u32 16, %s31
          %s1929 = ssub.s32 2048, 2048
          %1930 = vsyncadd %s1920, %s1929
          %s1931 = smul.addr %s1927, 2
          %s1932 = smul.addr %s1931, 64
          %s1933 = scalar_lea.hbm %s4, %s1932
          %s1934 = sshll.u32 %s1923, 4
          %s1935 = int_to_ptr.vmem [resolvable:$true] %s1934
          %1940 = dma.vmem_to_hbm [thread:$0]  %s1935, 2048, %s1933, %s1920, 128, 128, 8
        $region64: #{tpu_custom_call.1} parent=35 // pred_fallthru
          _
      $region36: #{tpu_custom_call.1} parent=5 // pred_fallthru
        _
      %p1941 = scmp.le.s32.totalorder 2, %s22
      // Predicated region
      $region65: #{tpu_custom_call.1} parent=5 // pred_check
        %p1942 = pneg %p1941
      $region66: #{tpu_custom_call.1} parent=5 // pred_check_branch
        %1944 = sbr.rel (%p1942) target = $region68
      $region67: #{tpu_custom_call.1} parent=5 // pred_region
        %s1945 = ssub.s32 %s22, 2
        // Predicated region
        $region69: #{tpu_custom_call.1} parent=67 // pred_check
          %p1946 = pneg %p169
        $region70: #{tpu_custom_call.1} parent=67 // pred_check_branch
          %1948 = sbr.rel (%p1946) target = $region72
        $region71: #{tpu_custom_call.1} parent=67 // pred_region
          %s1949 = sand.u32 %s154, 1
          %s1950 = scalar_lea.sflag [#allocation5], %s1949
          %s1951 = sand.u32 %s154, 1
          %s1952 = smul.addr %s1951, 128
          %s1953 = scalar_lea.vmem [#allocation11], %s1952
          %1954 = dma.done %s1950, 2048
        $region72: #{tpu_custom_call.1} parent=67 // pred_fallthru
          _
      $region68: #{tpu_custom_call.1} parent=5 // pred_fallthru
        _
    $region6: #{tpu_custom_call.1} parent=1 // loop_footer
      %s26 = sadd.s32 1, %s22
    $region7: #{tpu_custom_call.1} parent=1 // loop_footer_branch
      %21 = sbr.rel target = $region3
    $region8: #{tpu_custom_call.1} parent=1 // loop_exit
      _
    %1955 = vsyncpa [#allocation4], 1
    %s1956 = scalar_lea.sflag [#allocation4], 1
    %1957 = vsyncpa %s1956, 1
    %1958 = vsyncpa [#allocation7], 1
    %s1959 = scalar_lea.sflag [#allocation7], 1
    %1960 = vsyncpa %s1959, 1
    %1961 = vsyncpa [#allocation10], 1
    %s1962 = scalar_lea.sflag [#allocation10], 1
    %1963 = vsyncpa %s1962, 1
    %1964 = vsyncpa [#allocation5], 1
    %s1965 = scalar_lea.sflag [#allocation5], 1
    %1966 = vsyncpa %s1965, 1

</llo_original>
